<compile_context>
chip_gen: v7x
topology: tpu7x:2x2x1
jax: 0.10.0
libtpu: 0.0.40
codegen_flags: <defaults>
</compile_context>

<pallas_src>
import functools

import jax
import jax.numpy as jnp
from jax.experimental import pallas as pl
from jax.experimental.pallas import tpu as pltpu

TM_MAX = 512   # max batch rows per grid step (amortizes per-step overhead)


def _round_up(x, m):
    return (x + m - 1) // m * m


def dqn_kernel(x_ref, w1_ref, w23_ref, b_ref, o_ref):
    """One TM-row batch tile of the 3-layer MLP.

    x_ref  : (TM, n_obs)            f32   raw observations (cast to bf16 here)
    w1_ref : (n_obs, H)             bf16  layer1 weight (pre-transposed)
    w23_ref: (H, H + NAP)           bf16  [layer2 | layer3] weights packed
    b_ref  : (3, max(H, NAP))       f32   packed biases [b1; b2; b3]
    o_ref  : (TM, NAP)              f32   narrow Q-value block (NAP = n_actions
                                          rounded up to 8, NOT 128)
    """
    hidden = w1_ref.shape[1]
    nap = o_ref.shape[1]

    x = x_ref[...].astype(jnp.bfloat16)

    # layer1 + relu (bf16 MXU matmul, f32 accumulate / epilogue)
    h = jnp.dot(x, w1_ref[...], preferred_element_type=jnp.float32)
    h = jnp.maximum(h + b_ref[0:1, :hidden], 0.0)

    # layer2 + relu
    h = jnp.dot(h.astype(jnp.bfloat16), w23_ref[:, :hidden],
                preferred_element_type=jnp.float32)
    h = jnp.maximum(h + b_ref[1:2, :hidden], 0.0)

    # layer3 (no activation); padded action columns stay exactly 0
    out = jnp.dot(h.astype(jnp.bfloat16), w23_ref[:, hidden:hidden + nap],
                  preferred_element_type=jnp.float32)
    o_ref[...] = (out + b_ref[2:3, :nap]).astype(o_ref.dtype)
    # TODO(synk): the DQN readout (argmax_a / max_a / Q(s, a_taken) gather)
    # could be fused here as additional tiny per-row outputs, but that changes
    # the module's forward() signature, so it is left to the training step.


def pack_dqn_params(w1, b1, w2, b2, w3, b3):
    """Pad / pack / downcast parameters once; reuse across forward calls.

    Inputs are pre-transposed weights W_T[in, out] and biases (broadcastable).
    Returns ((w1p, w23p, b_packed), n_actions).
    """
    n_obs, hidden = w1.shape
    assert w2.shape == (hidden, hidden)
    n_actions = w3.shape[1]
    nap = _round_up(n_actions, 8)

    w1p = w1.astype(jnp.bfloat16)

    # Pack [w2 | w3] into one resident bf16 array -> one DMA instead of two.
    w23p = jnp.zeros((hidden, hidden + nap), jnp.bfloat16)
    w23p = w23p.at[:, :hidden].set(w2.astype(jnp.bfloat16))
    w23p = w23p.at[:, hidden:hidden + n_actions].set(w3.astype(jnp.bfloat16))

    bcols = max(hidden, nap)
    bp = jnp.zeros((3, bcols), jnp.float32)
    bp = bp.at[0, :hidden].set(jnp.reshape(b1, (-1,)))
    bp = bp.at[1, :hidden].set(jnp.reshape(b2, (-1,)))
    bp = bp.at[2, :n_actions].set(jnp.reshape(b3, (-1,)))
    return (w1p, w23p, bp), n_actions


@functools.partial(jax.jit, static_argnames=("n_actions",))
def dqn_forward(x, params, n_actions):
    w1p, w23p, bp = params
    batch, n_obs = x.shape
    hidden = w1p.shape[1]
    nap = w23p.shape[1] - hidden

    # Tile selection: single tile for small batches (no per-step overhead),
    # TM_MAX-row tiles (grid >= 2, parallel across v7x TensorCores) otherwise.
    bpad = _round_up(batch, 8)
    if bpad > TM_MAX:
        tm = TM_MAX
        bpad = _round_up(bpad, tm)
    else:
        tm = bpad
    xp = x if bpad == batch else jnp.pad(x, ((0, bpad - batch), (0, 0)))

    grid = (bpad // tm,)
    flops = 2 * bpad * (n_obs * hidden + hidden * hidden + hidden * nap)
    bytes_accessed = (xp.size * 4 + w1p.size * 2 + w23p.size * 2 +
                      bp.size * 4 + bpad * nap * 4)

    out = pl.pallas_call(
        dqn_kernel,
        out_shape=jax.ShapeDtypeStruct((bpad, nap), jnp.float32),
        grid=grid,
        in_specs=[
            pl.BlockSpec((tm, n_obs), lambda i: (i, 0)),   # x tile (f32, raw)
            pl.BlockSpec(w1p.shape, lambda i: (0, 0)),     # w1   (VMEM-resident)
            pl.BlockSpec(w23p.shape, lambda i: (0, 0)),    # [w2|w3] (resident)
            pl.BlockSpec(bp.shape, lambda i: (0, 0)),      # packed biases
        ],
        out_specs=pl.BlockSpec((tm, nap), lambda i: (i, 0)),
        compiler_params=pltpu.CompilerParams(
            dimension_semantics=("parallel",)),
        cost_estimate=pl.CostEstimate(
            flops=flops, transcendentals=0, bytes_accessed=bytes_accessed),
    )(xp, w1p, w23p, bp)

    return out[:batch, :n_actions]


def init_linear_params(key, fan_in, fan_out):
    """Deterministic init mimicking PyTorch nn.Linear default U[-1/sqrt(fan_in), +].

    Returns (W_T, b) with W_T shaped [fan_in, fan_out], b shaped [1, fan_out].
    """
    kw, kb = jax.random.split(key)
    bound = 1.0 / (fan_in ** 0.5)
    w_t = jax.random.uniform(kw, (fan_in, fan_out), jnp.float32, -bound, bound)
    b = jax.random.uniform(kb, (1, fan_out), jnp.float32, -bound, bound)
    return w_t, b


if __name__ == "__main__":
    # CartPole-like DQN shapes; batch=1024 -> two TM=512 tiles (exercises the
    # parallel batch grid / VMEM-resident packed weights / narrow output path).
    batch = 1024
    n_observations = 4
    hidden_layer = 128
    n_actions = 2

    key = jax.random.PRNGKey(0)
    kx, k1, k2, k3 = jax.random.split(key, 4)

    x = jax.random.normal(kx, (batch, n_observations), jnp.float32)
    w1, b1 = init_linear_params(k1, n_observations, hidden_layer)
    w2, b2 = init_linear_params(k2, hidden_layer, hidden_layer)
    w3, b3 = init_linear_params(k3, hidden_layer, n_actions)

    params, na = pack_dqn_params(w1, b1, w2, b2, w3, b3)
    out = dqn_forward(x, params, n_actions=na)
    out = jax.block_until_ready(out)

    # Pure-JAX reference mimicking the kernel's bf16 weight/activation precision.
    hp = jax.lax.Precision.HIGHEST
    f32 = jnp.float32
    xb = x.astype(jnp.bfloat16).astype(f32)
    w1b = w1.astype(jnp.bfloat16).astype(f32)
    w2b = w2.astype(jnp.bfloat16).astype(f32)
    w3b = w3.astype(jnp.bfloat16).astype(f32)
    h = jnp.maximum(jnp.dot(xb, w1b, precision=hp) + b1, 0.0)
    h = h.astype(jnp.bfloat16).astype(f32)
    h = jnp.maximum(jnp.dot(h, w2b, precision=hp) + b2, 0.0)
    h = h.astype(jnp.bfloat16).astype(f32)
    ref = jnp.dot(h, w3b, precision=hp) + b3

    assert out.shape == (batch, n_actions)
    assert out.dtype == jnp.float32
    assert jnp.allclose(out, ref, atol=2e-3, rtol=2e-3), "mismatch vs reference"

    print("KERNEL_OK")
</pallas_src>

<mosaic_0001>
module attributes {stable_mosaic.version = 11 : i64} {
  func.func @dqn_kernel(%arg0: i32, %arg1: memref<512x4xf32, #tpu.memory_space<vmem>>, %arg2: memref<4x128xbf16, #tpu.memory_space<vmem>>, %arg3: memref<128x136xbf16, #tpu.memory_space<vmem>>, %arg4: memref<3x128xf32, #tpu.memory_space<vmem>>, %arg5: memref<512x8xf32, #tpu.memory_space<vmem>>) attributes {dimension_semantics = [#tpu.dimension_semantics<parallel>], iteration_bounds = array<i64: 2>, scalar_prefetch = 0 : i64, scratch_operands = 0 : i64, tpu.core_type = #tpu.core_type<tc>, window_params = [{transform_indices = @transform_0, window_bounds = array<i64: 512, 4>}, {pipeline_mode = #tpu.pipeline_mode<synchronous>, transform_indices = @transform_1, window_bounds = array<i64: 4, 128>}, {pipeline_mode = #tpu.pipeline_mode<synchronous>, transform_indices = @transform_2, window_bounds = array<i64: 128, 136>}, {pipeline_mode = #tpu.pipeline_mode<synchronous>, transform_indices = @transform_3, window_bounds = array<i64: 3, 128>}, {transform_indices = @transform_4, window_bounds = array<i64: 512, 8>}]} {
    %c0 = arith.constant 0 : index
    %c0_0 = arith.constant 0 : index
    %0 = vector.load %arg1[%c0, %c0_0] : memref<512x4xf32, #tpu.memory_space<vmem>>, vector<512x4xf32>
    %1 = arith.truncf %0 : vector<512x4xf32> to vector<512x4xbf16>
    %c0_1 = arith.constant 0 : index
    %c0_2 = arith.constant 0 : index
    %2 = vector.load %arg2[%c0_1, %c0_2] : memref<4x128xbf16, #tpu.memory_space<vmem>>, vector<4x128xbf16>
    %cst = arith.constant dense<0.000000e+00> : vector<512x128xf32>
    %3 = tpu.matmul %1, %2, %cst {dimension_numbers = #tpu.dot_dimension_numbers<[1], [0], [0], [1], [0, 0, 1, 1], [], []>} : vector<512x4xbf16>, vector<4x128xbf16>, vector<512x128xf32> -> vector<512x128xf32>
    %c0_3 = arith.constant 0 : index
    %c0_4 = arith.constant 0 : index
    %4 = vector.load %arg4[%c0_3, %c0_4] : memref<3x128xf32, #tpu.memory_space<vmem>>, vector<1x128xf32>
    %5 = vector.broadcast %4 : vector<1x128xf32> to vector<512x128xf32>
    %6 = arith.addf %3, %5 : vector<512x128xf32>
    %cst_5 = arith.constant 0.000000e+00 : f32
    %7 = vector.broadcast %cst_5 : f32 to vector<512x128xf32>
    %8 = arith.maximumf %6, %7 : vector<512x128xf32>
    %9 = arith.truncf %8 : vector<512x128xf32> to vector<512x128xbf16>
    %c0_6 = arith.constant 0 : index
    %c0_7 = arith.constant 0 : index
    %10 = vector.load %arg3[%c0_6, %c0_7] : memref<128x136xbf16, #tpu.memory_space<vmem>>, vector<128x128xbf16>
    %cst_8 = arith.constant dense<0.000000e+00> : vector<512x128xf32>
    %11 = tpu.matmul %9, %10, %cst_8 {dimension_numbers = #tpu.dot_dimension_numbers<[1], [0], [0], [1], [0, 0, 1, 1], [], []>} : vector<512x128xbf16>, vector<128x128xbf16>, vector<512x128xf32> -> vector<512x128xf32>
    %c1 = arith.constant 1 : index
    %c0_9 = arith.constant 0 : index
    %12 = vector.load %arg4[%c1, %c0_9] : memref<3x128xf32, #tpu.memory_space<vmem>>, vector<1x128xf32>
    %13 = vector.broadcast %12 : vector<1x128xf32> to vector<512x128xf32>
    %14 = arith.addf %11, %13 : vector<512x128xf32>
    %cst_10 = arith.constant 0.000000e+00 : f32
    %15 = vector.broadcast %cst_10 : f32 to vector<512x128xf32>
    %16 = arith.maximumf %14, %15 : vector<512x128xf32>
    %17 = arith.truncf %16 : vector<512x128xf32> to vector<512x128xbf16>
    %c0_11 = arith.constant 0 : index
    %c128 = arith.constant 128 : index
    %18 = vector.load %arg3[%c0_11, %c128] : memref<128x136xbf16, #tpu.memory_space<vmem>>, vector<128x8xbf16>
    %cst_12 = arith.constant dense<0.000000e+00> : vector<512x8xf32>
    %19 = tpu.matmul %17, %18, %cst_12 {dimension_numbers = #tpu.dot_dimension_numbers<[1], [0], [0], [1], [0, 0, 1, 1], [], []>} : vector<512x128xbf16>, vector<128x8xbf16>, vector<512x8xf32> -> vector<512x8xf32>
    %c2 = arith.constant 2 : index
    %c0_13 = arith.constant 0 : index
    %20 = vector.load %arg4[%c2, %c0_13] : memref<3x128xf32, #tpu.memory_space<vmem>>, vector<1x8xf32>
    %21 = vector.broadcast %20 : vector<1x8xf32> to vector<512x8xf32>
    %22 = arith.addf %19, %21 : vector<512x8xf32>
    %c0_14 = arith.constant 0 : index
    %c0_15 = arith.constant 0 : index
    %23 = vector.load %arg5[%c0_14, %c0_15] : memref<512x8xf32, #tpu.memory_space<vmem>>, vector<512x8xf32>
    tpu.vector_store %arg5[%c0_14, %c0_15], %22 {strides = array<i32>} : memref<512x8xf32, #tpu.memory_space<vmem>>, vector<512x8xf32>,
    return
  }
  func.func @transform_0(%arg0: i32) -> (i32, i32) {
    %c0_i32 = arith.constant 0 : i32
    %c0_i32_0 = arith.constant 0 : i32
    return %arg0, %c0_i32 : i32, i32
  }
  func.func @transform_1(%arg0: i32) -> (i32, i32) {
    %c0_i32 = arith.constant 0 : i32
    %c0_i32_0 = arith.constant 0 : i32
    %c0_i32_1 = arith.constant 0 : i32
    return %c0_i32, %c0_i32_0 : i32, i32
  }
  func.func @transform_2(%arg0: i32) -> (i32, i32) {
    %c0_i32 = arith.constant 0 : i32
    %c0_i32_0 = arith.constant 0 : i32
    %c0_i32_1 = arith.constant 0 : i32
    return %c0_i32, %c0_i32_0 : i32, i32
  }
  func.func @transform_3(%arg0: i32) -> (i32, i32) {
    %c0_i32 = arith.constant 0 : i32
    %c0_i32_0 = arith.constant 0 : i32
    %c0_i32_1 = arith.constant 0 : i32
    return %c0_i32, %c0_i32_0 : i32, i32
  }
  func.func @transform_4(%arg0: i32) -> (i32, i32) {
    %c0_i32 = arith.constant 0 : i32
    %c0_i32_0 = arith.constant 0 : i32
    return %arg0, %c0_i32 : i32, i32
  }
}

</mosaic_0001>

<llo_original>
// kernel: dqn_forward.1
$region0: #{dqn_forward.1}
  #allocation0 [shape = 'u32[]', space=smem, size = 0x4, offset = 0x4, fixed_abs, tag = 'smem constant byte address 0x4 - core index']
  #allocation1 [shape = 'u32[144,128]{1,0:T(1,128)}', space=vmem, size = 0x12000, scoped, tag = 'internal scratch']
  %s0 = inlined_call_operand.vmem [shape: f32[1024,4], index: 0, kind: input, shape index: {}]
  %s1 = inlined_call_operand.vmem [shape: bf16[4,128], index: 1, kind: input, shape index: {}]
  %s2 = inlined_call_operand.vmem [shape: bf16[128,136], index: 2, kind: input, shape index: {}]
  %s3 = inlined_call_operand.vmem [shape: f32[3,128], index: 3, kind: input, shape index: {}]
  %s4 = inlined_call_operand.vmem [shape: f32[1024,8], index: 4, kind: output, shape index: {}]
  %s5 = sld [smem:[#allocation0]]
  $region49: #{dqn_forward.1} parent=0
    _
  %s7 = ssub.s32 1, %s5
  %s8 = scalar_select 0, %s7, %s5
  loop: start=0, step=1, limit=4
  $region2: #{dqn_forward.1} parent=0 // loop_pre_header
    _
  $region3: #{dqn_forward.1} parent=0 // loop_header
    %s10 = sphi 0, %s14
    %p11 = scmp.ge.s32.totalorder %s10, 4
    %s20 = sphi 0, %s22
    %s23 = sphi 0, %s20
    %s24 = sphi 0, %s23
    %s40 = sphi 0, %s24
    %s44 = sphi 0, %s44
    %s46 = sphi 0, %s44
    %s47 = sphi 0, %s46
    %s61 = sphi 0, %s47
    %s65 = sphi 0, %s65
    %s67 = sphi 0, %s65
    %s68 = sphi 0, %s67
    %s82 = sphi 0, %s68
    %s86 = sphi 0, %s86
    %s88 = sphi 0, %s86
    %s89 = sphi 0, %s88
    %s103 = sphi 0, %s89
    %s109 = sphi 0, %s111
    %s112 = sphi 0, %s109
    %s113 = sphi 0, %s112
    %s129 = sphi 0, %s113
  $region4: #{dqn_forward.1} parent=0 // loop_header_branch
    %13 = sbr.rel (%p11) target = $region8
  $region5: #{dqn_forward.1} parent=0 // loop_body
    %s15 = ssub.s32 %s10, 1
    %s16 = ssub.s32 %s10, 2
    %s17 = sadd.s32 %s10, 1
    %s18 = ssub.s32 %s10, %s17
    %p19 = scmp.eq.s32.totalorder %s18, 0
    %s21 = sadd.s32 %s20, 1
    %s22 = scalar_select %p19, %s20, %s21
    %p25 = pneg %p19
    %p26 = scmp.eq.s32.totalorder %s10, 1
    %p27 = por %p25, %p26
    %p28 = scmp.ne.s32.totalorder %s20, %s23
    %p29 = scmp.eq.s32.totalorder %s10, 0
    %p30 = por %p28, %p29
    %p31 = scmp.ne.s32.totalorder %s20, %s23
    %p32 = scmp.eq.s32.totalorder %s15, 1
    %p33 = por %p31, %p32
    %p34 = scmp.ne.s32.totalorder %s23, %s24
    %p35 = scmp.eq.s32.totalorder %s15, 0
    %p36 = por %p34, %p35
    %p37 = scmp.ne.s32.totalorder %s23, %s24
    %p38 = scmp.eq.s32.totalorder %s16, 1
    %p39 = por %p37, %p38
    %p41 = scmp.ne.s32.totalorder %s24, %s40
    %p42 = scmp.eq.s32.totalorder %s16, 0
    %p43 = por %p41, %p42
    %s45 = sadd.s32 %s44, 1
    %p48 = scmp.eq.s32.totalorder %s10, 1
    %p49 = scmp.ne.s32.totalorder %s44, %s46
    %p50 = scmp.eq.s32.totalorder %s10, 0
    %p51 = por %p49, %p50
    %p52 = scmp.ne.s32.totalorder %s44, %s46
    %p53 = scmp.eq.s32.totalorder %s15, 1
    %p54 = por %p52, %p53
    %p55 = scmp.ne.s32.totalorder %s46, %s47
    %p56 = scmp.eq.s32.totalorder %s15, 0
    %p57 = por %p55, %p56
    %p58 = scmp.ne.s32.totalorder %s46, %s47
    %p59 = scmp.eq.s32.totalorder %s16, 1
    %p60 = por %p58, %p59
    %p62 = scmp.ne.s32.totalorder %s47, %s61
    %p63 = scmp.eq.s32.totalorder %s16, 0
    %p64 = por %p62, %p63
    %s66 = sadd.s32 %s65, 1
    %p69 = scmp.eq.s32.totalorder %s10, 1
    %p70 = scmp.ne.s32.totalorder %s65, %s67
    %p71 = scmp.eq.s32.totalorder %s10, 0
    %p72 = por %p70, %p71
    %p73 = scmp.ne.s32.totalorder %s65, %s67
    %p74 = scmp.eq.s32.totalorder %s15, 1
    %p75 = por %p73, %p74
    %p76 = scmp.ne.s32.totalorder %s67, %s68
    %p77 = scmp.eq.s32.totalorder %s15, 0
    %p78 = por %p76, %p77
    %p79 = scmp.ne.s32.totalorder %s67, %s68
    %p80 = scmp.eq.s32.totalorder %s16, 1
    %p81 = por %p79, %p80
    %p83 = scmp.ne.s32.totalorder %s68, %s82
    %p84 = scmp.eq.s32.totalorder %s16, 0
    %p85 = por %p83, %p84
    %s87 = sadd.s32 %s86, 1
    %p90 = scmp.eq.s32.totalorder %s10, 1
    %p91 = scmp.ne.s32.totalorder %s86, %s88
    %p92 = scmp.eq.s32.totalorder %s10, 0
    %p93 = por %p91, %p92
    %p94 = scmp.ne.s32.totalorder %s86, %s88
    %p95 = scmp.eq.s32.totalorder %s15, 1
    %p96 = por %p94, %p95
    %p97 = scmp.ne.s32.totalorder %s88, %s89
    %p98 = scmp.eq.s32.totalorder %s15, 0
    %p99 = por %p97, %p98
    %p100 = scmp.ne.s32.totalorder %s88, %s89
    %p101 = scmp.eq.s32.totalorder %s16, 1
    %p102 = por %p100, %p101
    %p104 = scmp.ne.s32.totalorder %s89, %s103
    %p105 = scmp.eq.s32.totalorder %s16, 0
    %p106 = por %p104, %p105
    %s107 = ssub.s32 %s10, %s17
    %p108 = scmp.eq.s32.totalorder %s107, 0
    %s110 = sadd.s32 %s109, 1
    %s111 = scalar_select %p108, %s109, %s110
    %p114 = pneg %p108
    %p115 = scmp.eq.s32.totalorder %s10, 1
    %p116 = por %p114, %p115
    %p117 = scmp.ne.s32.totalorder %s109, %s112
    %p118 = scmp.eq.s32.totalorder %s10, 0
    %p119 = por %p117, %p118
    %p120 = scmp.ne.s32.totalorder %s109, %s112
    %p121 = scmp.eq.s32.totalorder %s15, 1
    %p122 = por %p120, %p121
    %p123 = scmp.ne.s32.totalorder %s112, %s113
    %p124 = scmp.eq.s32.totalorder %s15, 0
    %p125 = por %p123, %p124
    %p126 = scmp.ne.s32.totalorder %s112, %s113
    %p127 = scmp.eq.s32.totalorder %s16, 1
    %p128 = por %p126, %p127
    %p130 = scmp.ne.s32.totalorder %s113, %s129
    %p131 = scmp.eq.s32.totalorder %s16, 0
    %p132 = por %p130, %p131
    %p133 = scmp.le.s32.totalorder 1, %s10
    %p134 = scmp.lt.s32.totalorder %s10, 3
    %p135 = pnand %p133, %p134
    %p136 = pneg %p135
    // Predicated region
    $region9: #{dqn_forward.1} parent=5 // pred_check
      _
    $region10: #{dqn_forward.1} parent=5 // pred_check_branch
      %138 = sbr.rel (%p135) target = $region12
    $region11: #{dqn_forward.1} parent=5 // pred_region
      %s139 = ssub.s32 %s10, 1
      // Predicated region
      $region13: #{dqn_forward.1} parent=11 // pred_check
        %p140 = pneg %p57
      $region14: #{dqn_forward.1} parent=11 // pred_check_branch
        %142 = sbr.rel (%p140) target = $region16
      $region15: #{dqn_forward.1} parent=11 // pred_region
        _
      $region16: #{dqn_forward.1} parent=11 // pred_fallthru
        _
      // Predicated region
      $region17: #{dqn_forward.1} parent=11 // pred_check
        %p143 = pneg %p78
      $region18: #{dqn_forward.1} parent=11 // pred_check_branch
        %145 = sbr.rel (%p143) target = $region20
      $region19: #{dqn_forward.1} parent=11 // pred_region
        _
      $region20: #{dqn_forward.1} parent=11 // pred_fallthru
        _
      // Predicated region
      $region21: #{dqn_forward.1} parent=11 // pred_check
        %p146 = pneg %p99
      $region22: #{dqn_forward.1} parent=11 // pred_check_branch
        %148 = sbr.rel (%p146) target = $region24
      $region23: #{dqn_forward.1} parent=11 // pred_region
        _
      $region24: #{dqn_forward.1} parent=11 // pred_fallthru
        _
    $region12: #{dqn_forward.1} parent=5 // pred_fallthru
      _
    %p149 = scmp.lt.s32.totalorder %s10, 2
    // Predicated region
    $region25: #{dqn_forward.1} parent=5 // pred_check
      %p150 = pneg %p149
    $region26: #{dqn_forward.1} parent=5 // pred_check_branch
      %152 = sbr.rel (%p150) target = $region28
    $region27: #{dqn_forward.1} parent=5 // pred_region
      // Predicated region
      $region29: #{dqn_forward.1} parent=27 // pred_check
        %p153 = pneg %p30
      $region30: #{dqn_forward.1} parent=27 // pred_check_branch
        %155 = sbr.rel (%p153) target = $region32
      $region31: #{dqn_forward.1} parent=27 // pred_region
        %s156 = smul.u32 64, %s10
        %p157 = scmp.lt.s32.totalorder %s156, 127
        %s158 = scalar_select %p157, %s156, 127
        %s159 = smul.addr %s158, 8
        %s160 = scalar_lea.vmem %s0, %s159
        %s161 = smul.u32 64, %s10
      $region32: #{dqn_forward.1} parent=27 // pred_fallthru
        _
    $region28: #{dqn_forward.1} parent=5 // pred_fallthru
      _
    %p162 = scmp.le.s32.totalorder 1, %s10
    %p163 = scmp.lt.s32.totalorder %s10, 3
    %p164 = pnand %p162, %p163
    %p165 = pneg %p164
    // Predicated region
    $region33: #{dqn_forward.1} parent=5 // pred_check
      _
    $region34: #{dqn_forward.1} parent=5 // pred_check_branch
      %167 = sbr.rel (%p164) target = $region36
    $region35: #{dqn_forward.1} parent=5 // pred_region
      %s168 = ssub.s32 %s10, 1
      %s169 = smul.u32 64, %s15
      %p170 = scmp.lt.s32.totalorder %s169, 127
      %s171 = scalar_select %p170, %s169, 127
      %s172 = smul.addr %s171, 8
      %s173 = scalar_lea.vmem %s0, %s172
      %p174 = pneg %p36
      %p175 = pneg %p33
      %p176 = pneg %p57
      %p177 = pneg %p54
      %p178 = pneg %p78
      %p179 = pneg %p75
      %p180 = pneg %p99
      %p181 = pneg %p96
      %p182 = pneg %p125
      %p183 = pneg %p122
      %s184 = smul.u32 64, %s15
      %p185 = scmp.lt.s32.totalorder %s184, 127
      %s186 = scalar_select %p185, %s184, 127
      %s187 = smul.addr %s186, 8
      %s188 = scalar_lea.vmem %s4, %s187
      %s189 = smul.u32 64, %s15
      %p190 = scmp.lt.s32.totalorder %s189, 127
      %s191 = scalar_select %p190, %s189, 127
      %s192 = smul.addr %s191, 8
      %s193 = scalar_lea.vmem %s0, %s192
      %s194 = smul.u32 64, %s15
      %s195 = smul.u32 64, %s15
      %p196 = scmp.lt.s32.totalorder %s195, 127
      %s197 = scalar_select %p196, %s195, 127
      %s198 = smul.addr %s197, 8
      %s199 = scalar_lea.vmem %s4, %s198
      %s200 = smul.u32 64, %s15
      %v202 = vld [vmem:[%s193] sm:$0xff]
      %v203 = vld [vmem:[%s193 + $0x8] sm:$0xff]
      %v204 = vld [vmem:[%s193 + $0x10] sm:$0xff]
      %v205 = vld [vmem:[%s193 + $0x18] sm:$0xff]
      %v206 = vld [vmem:[%s193 + $0x20] sm:$0xff]
      %v207 = vld [vmem:[%s193 + $0x28] sm:$0xff]
      %v208 = vld [vmem:[%s193 + $0x30] sm:$0xff]
      %v209 = vld [vmem:[%s193 + $0x38] sm:$0xff]
      %v210 = vld [vmem:[%s193 + $0x40] sm:$0xff]
      %v211 = vld [vmem:[%s193 + $0x48] sm:$0xff]
      %v212 = vld [vmem:[%s193 + $0x50] sm:$0xff]
      %v213 = vld [vmem:[%s193 + $0x58] sm:$0xff]
      %v214 = vld [vmem:[%s193 + $0x60] sm:$0xff]
      %v215 = vld [vmem:[%s193 + $0x68] sm:$0xff]
      %v216 = vld [vmem:[%s193 + $0x70] sm:$0xff]
      %v217 = vld [vmem:[%s193 + $0x78] sm:$0xff]
      %v218 = vld [vmem:[%s193 + $0x80] sm:$0xff]
      %v219 = vld [vmem:[%s193 + $0x88] sm:$0xff]
      %v220 = vld [vmem:[%s193 + $0x90] sm:$0xff]
      %v221 = vld [vmem:[%s193 + $0x98] sm:$0xff]
      %v222 = vld [vmem:[%s193 + $0xa0] sm:$0xff]
      %v223 = vld [vmem:[%s193 + $0xa8] sm:$0xff]
      %v224 = vld [vmem:[%s193 + $0xb0] sm:$0xff]
      %v225 = vld [vmem:[%s193 + $0xb8] sm:$0xff]
      %v226 = vld [vmem:[%s193 + $0xc0] sm:$0xff]
      %v227 = vld [vmem:[%s193 + $0xc8] sm:$0xff]
      %v228 = vld [vmem:[%s193 + $0xd0] sm:$0xff]
      %v229 = vld [vmem:[%s193 + $0xd8] sm:$0xff]
      %v230 = vld [vmem:[%s193 + $0xe0] sm:$0xff]
      %v231 = vld [vmem:[%s193 + $0xe8] sm:$0xff]
      %v232 = vld [vmem:[%s193 + $0xf0] sm:$0xff]
      %v233 = vld [vmem:[%s193 + $0xf8] sm:$0xff]
      %v234 = vld [vmem:[%s193 + $0x100] sm:$0xff]
      %v235 = vld [vmem:[%s193 + $0x108] sm:$0xff]
      %v236 = vld [vmem:[%s193 + $0x110] sm:$0xff]
      %v237 = vld [vmem:[%s193 + $0x118] sm:$0xff]
      %v238 = vld [vmem:[%s193 + $0x120] sm:$0xff]
      %v239 = vld [vmem:[%s193 + $0x128] sm:$0xff]
      %v240 = vld [vmem:[%s193 + $0x130] sm:$0xff]
      %v241 = vld [vmem:[%s193 + $0x138] sm:$0xff]
      %v242 = vld [vmem:[%s193 + $0x140] sm:$0xff]
      %v243 = vld [vmem:[%s193 + $0x148] sm:$0xff]
      %v244 = vld [vmem:[%s193 + $0x150] sm:$0xff]
      %v245 = vld [vmem:[%s193 + $0x158] sm:$0xff]
      %v246 = vld [vmem:[%s193 + $0x160] sm:$0xff]
      %v247 = vld [vmem:[%s193 + $0x168] sm:$0xff]
      %v248 = vld [vmem:[%s193 + $0x170] sm:$0xff]
      %v249 = vld [vmem:[%s193 + $0x178] sm:$0xff]
      %v250 = vld [vmem:[%s193 + $0x180] sm:$0xff]
      %v251 = vld [vmem:[%s193 + $0x188] sm:$0xff]
      %v252 = vld [vmem:[%s193 + $0x190] sm:$0xff]
      %v253 = vld [vmem:[%s193 + $0x198] sm:$0xff]
      %v254 = vld [vmem:[%s193 + $0x1a0] sm:$0xff]
      %v255 = vld [vmem:[%s193 + $0x1a8] sm:$0xff]
      %v256 = vld [vmem:[%s193 + $0x1b0] sm:$0xff]
      %v257 = vld [vmem:[%s193 + $0x1b8] sm:$0xff]
      %v258 = vld [vmem:[%s193 + $0x1c0] sm:$0xff]
      %v259 = vld [vmem:[%s193 + $0x1c8] sm:$0xff]
      %v260 = vld [vmem:[%s193 + $0x1d0] sm:$0xff]
      %v261 = vld [vmem:[%s193 + $0x1d8] sm:$0xff]
      %v262 = vld [vmem:[%s193 + $0x1e0] sm:$0xff]
      %v263 = vld [vmem:[%s193 + $0x1e8] sm:$0xff]
      %v264 = vld [vmem:[%s193 + $0x1f0] sm:$0xff]
      %v265 = vld [vmem:[%s193 + $0x1f8] sm:$0xff]
      %v266 = vpack.c.bf16 %v203, %v202
      %v267 = vpack.c.bf16 %v205, %v204
      %v268 = vpack.c.bf16 %v207, %v206
      %v269 = vpack.c.bf16 %v209, %v208
      %v270 = vpack.c.bf16 %v211, %v210
      %v271 = vpack.c.bf16 %v213, %v212
      %v272 = vpack.c.bf16 %v215, %v214
      %v273 = vpack.c.bf16 %v217, %v216
      %v274 = vpack.c.bf16 %v219, %v218
      %v275 = vpack.c.bf16 %v221, %v220
      %v276 = vpack.c.bf16 %v223, %v222
      %v277 = vpack.c.bf16 %v225, %v224
      %v278 = vpack.c.bf16 %v227, %v226
      %v279 = vpack.c.bf16 %v229, %v228
      %v280 = vpack.c.bf16 %v231, %v230
      %v281 = vpack.c.bf16 %v233, %v232
      %v282 = vpack.c.bf16 %v235, %v234
      %v283 = vpack.c.bf16 %v237, %v236
      %v284 = vpack.c.bf16 %v239, %v238
      %v285 = vpack.c.bf16 %v241, %v240
      %v286 = vpack.c.bf16 %v243, %v242
      %v287 = vpack.c.bf16 %v245, %v244
      %v288 = vpack.c.bf16 %v247, %v246
      %v289 = vpack.c.bf16 %v249, %v248
      %v290 = vpack.c.bf16 %v251, %v250
      %v291 = vpack.c.bf16 %v253, %v252
      %v292 = vpack.c.bf16 %v255, %v254
      %v293 = vpack.c.bf16 %v257, %v256
      %v294 = vpack.c.bf16 %v259, %v258
      %v295 = vpack.c.bf16 %v261, %v260
      %v296 = vpack.c.bf16 %v263, %v262
      %v297 = vpack.c.bf16 %v265, %v264
      %v298 = vld [vmem:[%s1] sm:$0x3]
      %v299 = vld [vmem:[%s3] sm:$0x1]
      %v300 = vlaneseq
      %v301 = vshrl.u32 %v300, 7
      %v302 = vsub.s32 0, %v301
      %v303 = vrot.slane %v299, %v302
      %vm304 = vcmask 31744
      %v306 = vsel %vm304, %v266, 0
      %v309 = vsel %vm304, %v267, 0
      %v312 = vsel %vm304, %v268, 0
      %v315 = vsel %vm304, %v269, 0
      %v318 = vsel %vm304, %v270, 0
      %v321 = vsel %vm304, %v271, 0
      %v324 = vsel %vm304, %v272, 0
      %v327 = vsel %vm304, %v273, 0
      %v330 = vsel %vm304, %v274, 0
      %v333 = vsel %vm304, %v275, 0
      %v336 = vsel %vm304, %v276, 0
      %v339 = vsel %vm304, %v277, 0
      %v342 = vsel %vm304, %v278, 0
      %v345 = vsel %vm304, %v279, 0
      %v348 = vsel %vm304, %v280, 0
      %v351 = vsel %vm304, %v281, 0
      %v354 = vsel %vm304, %v282, 0
      %v357 = vsel %vm304, %v283, 0
      %v360 = vsel %vm304, %v284, 0
      %v363 = vsel %vm304, %v285, 0
      %v366 = vsel %vm304, %v286, 0
      %v369 = vsel %vm304, %v287, 0
      %v372 = vsel %vm304, %v288, 0
      %v375 = vsel %vm304, %v289, 0
      %v378 = vsel %vm304, %v290, 0
      %v381 = vsel %vm304, %v291, 0
      %v384 = vsel %vm304, %v292, 0
      %v387 = vsel %vm304, %v293, 0
      %v390 = vsel %vm304, %v294, 0
      %v393 = vsel %vm304, %v295, 0
      %v396 = vsel %vm304, %v296, 0
      %v399 = vsel %vm304, %v297, 0
      %vm401 = vcmask 1041408
      %v403 = vsel %vm401, %v298, 0
      %405 = vmatprep.subr.bf16.mxu0 0
      %406 = vmatpush1.bf16.msra.mxu0 %v403
      %407 = vmatprep.subr.bf16.mxu0 0
      %408 = vmatpush1.bf16.msra.mxu0 0
      %409 = vmatprep.subr.bf16.mxu0 0
      %410 = vmatpush1.bf16.msra.mxu0 0
      %411 = vmatprep.subr.bf16.mxu0 0
      %412 = vmatpush1.bf16.msra.mxu0 0
      %413 = vmatprep.subr.bf16.mxu0 0
      %414 = vmatpush1.bf16.msra.mxu0 0
      %415 = vmatprep.subr.bf16.mxu0 0
      %416 = vmatpush1.bf16.msra.mxu0 0
      %417 = vmatprep.subr.bf16.mxu0 0
      %418 = vmatpush1.bf16.msra.mxu0 0
      %419 = vmatprep.subr.bf16.mxu0 0
      %420 = vmatpush1.bf16.msra.mxu0 0
      %421 = vmatprep.subr.bf16.mxu0 0
      %422 = vmatpush1.bf16.msra.mxu0 0
      %423 = vmatprep.subr.bf16.mxu0 0
      %424 = vmatpush1.bf16.msra.mxu0 0
      %425 = vmatprep.subr.bf16.mxu0 0
      %426 = vmatpush1.bf16.msra.mxu0 0
      %427 = vmatprep.subr.bf16.mxu0 0
      %428 = vmatpush1.bf16.msra.mxu0 0
      %429 = vmatprep.subr.bf16.mxu0 0
      %430 = vmatpush1.bf16.msra.mxu0 0
      %431 = vmatprep.subr.bf16.mxu0 0
      %432 = vmatpush1.bf16.msra.mxu0 0
      %433 = vmatprep.subr.bf16.mxu0 0
      %434 = vmatpush1.bf16.msra.mxu0 0
      %435 = vmatprep.subr.bf16.mxu0 0
      %436 = vmatpush1.bf16.msra.mxu0 0
      %437 = vmatprep.mubr.bf16.mxu0 0
      %438 = vmatmul.mubr.bf16.gmra.mrb[0].mxu0 %v306
      %v439 = vpop.f32.mrb[0].mxu0
      %v440 = vadd.f32 %v303, %v439
      %v441 = vpop.f32.mrb[0].mxu0
      %v442 = vpop.f32.mrb[0].mxu0
      %v443 = vadd.f32 %v303, %v442
      %v444 = vpop.f32.mrb[0].mxu0
      %445 = vmatprep.mubr.bf16.mxu0 0
      %446 = vmatmul.mubr.bf16.gmra.mrb[0].mxu0 %v309
      %v447 = vpop.f32.mrb[0].mxu0
      %v448 = vadd.f32 %v303, %v447
      %v449 = vpop.f32.mrb[0].mxu0
      %v450 = vpop.f32.mrb[0].mxu0
      %v451 = vadd.f32 %v303, %v450
      %v452 = vpop.f32.mrb[0].mxu0
      %453 = vmatprep.mubr.bf16.mxu0 0
      %454 = vmatmul.mubr.bf16.gmra.mrb[0].mxu0 %v312
      %v455 = vpop.f32.mrb[0].mxu0
      %v456 = vadd.f32 %v303, %v455
      %v457 = vpop.f32.mrb[0].mxu0
      %v458 = vpop.f32.mrb[0].mxu0
      %v459 = vadd.f32 %v303, %v458
      %v460 = vpop.f32.mrb[0].mxu0
      %461 = vmatprep.mubr.bf16.mxu0 0
      %462 = vmatmul.mubr.bf16.gmra.mrb[0].mxu0 %v315
      %v463 = vpop.f32.mrb[0].mxu0
      %v464 = vadd.f32 %v303, %v463
      %v465 = vpop.f32.mrb[0].mxu0
      %v466 = vpop.f32.mrb[0].mxu0
      %v467 = vadd.f32 %v303, %v466
      %v468 = vpop.f32.mrb[0].mxu0
      %469 = vmatprep.mubr.bf16.mxu0 0
      %470 = vmatmul.mubr.bf16.gmra.mrb[0].mxu0 %v318
      %v471 = vpop.f32.mrb[0].mxu0
      %v472 = vadd.f32 %v303, %v471
      %v473 = vpop.f32.mrb[0].mxu0
      %v474 = vpop.f32.mrb[0].mxu0
      %v475 = vadd.f32 %v303, %v474
      %v476 = vpop.f32.mrb[0].mxu0
      %477 = vmatprep.mubr.bf16.mxu0 0
      %478 = vmatmul.mubr.bf16.gmra.mrb[0].mxu0 %v321
      %v479 = vpop.f32.mrb[0].mxu0
      %v480 = vadd.f32 %v303, %v479
      %v481 = vpop.f32.mrb[0].mxu0
      %v482 = vpop.f32.mrb[0].mxu0
      %v483 = vadd.f32 %v303, %v482
      %v484 = vpop.f32.mrb[0].mxu0
      %485 = vmatprep.mubr.bf16.mxu0 0
      %486 = vmatmul.mubr.bf16.gmra.mrb[0].mxu0 %v324
      %v487 = vpop.f32.mrb[0].mxu0
      %v488 = vadd.f32 %v303, %v487
      %v489 = vpop.f32.mrb[0].mxu0
      %v490 = vpop.f32.mrb[0].mxu0
      %v491 = vadd.f32 %v303, %v490
      %v492 = vpop.f32.mrb[0].mxu0
      %493 = vmatprep.mubr.bf16.mxu0 0
      %494 = vmatmul.mubr.bf16.gmra.mrb[0].mxu0 %v327
      %v495 = vpop.f32.mrb[0].mxu0
      %v496 = vadd.f32 %v303, %v495
      %v497 = vpop.f32.mrb[0].mxu0
      %v498 = vpop.f32.mrb[0].mxu0
      %v499 = vadd.f32 %v303, %v498
      %v500 = vpop.f32.mrb[0].mxu0
      %501 = vmatprep.mubr.bf16.mxu0 0
      %502 = vmatmul.mubr.bf16.gmra.mrb[0].mxu0 %v330
      %v503 = vpop.f32.mrb[0].mxu0
      %v504 = vadd.f32 %v303, %v503
      %v505 = vpop.f32.mrb[0].mxu0
      %v506 = vpop.f32.mrb[0].mxu0
      %v507 = vadd.f32 %v303, %v506
      %v508 = vpop.f32.mrb[0].mxu0
      %509 = vmatprep.mubr.bf16.mxu0 0
      %510 = vmatmul.mubr.bf16.gmra.mrb[0].mxu0 %v333
      %v511 = vpop.f32.mrb[0].mxu0
      %v512 = vadd.f32 %v303, %v511
      %v513 = vpop.f32.mrb[0].mxu0
      %v514 = vpop.f32.mrb[0].mxu0
      %v515 = vadd.f32 %v303, %v514
      %v516 = vpop.f32.mrb[0].mxu0
      %517 = vmatprep.mubr.bf16.mxu0 0
      %518 = vmatmul.mubr.bf16.gmra.mrb[0].mxu0 %v336
      %v519 = vpop.f32.mrb[0].mxu0
      %v520 = vadd.f32 %v303, %v519
      %v521 = vpop.f32.mrb[0].mxu0
      %v522 = vpop.f32.mrb[0].mxu0
      %v523 = vadd.f32 %v303, %v522
      %v524 = vpop.f32.mrb[0].mxu0
      %525 = vmatprep.mubr.bf16.mxu0 0
      %526 = vmatmul.mubr.bf16.gmra.mrb[0].mxu0 %v339
      %v527 = vpop.f32.mrb[0].mxu0
      %v528 = vadd.f32 %v303, %v527
      %v529 = vpop.f32.mrb[0].mxu0
      %v530 = vpop.f32.mrb[0].mxu0
      %v531 = vadd.f32 %v303, %v530
      %v532 = vpop.f32.mrb[0].mxu0
      %533 = vmatprep.mubr.bf16.mxu0 0
      %534 = vmatmul.mubr.bf16.gmra.mrb[0].mxu0 %v342
      %v535 = vpop.f32.mrb[0].mxu0
      %v536 = vadd.f32 %v303, %v535
      %v537 = vpop.f32.mrb[0].mxu0
      %v538 = vpop.f32.mrb[0].mxu0
      %v539 = vadd.f32 %v303, %v538
      %v540 = vpop.f32.mrb[0].mxu0
      %541 = vmatprep.mubr.bf16.mxu0 0
      %542 = vmatmul.mubr.bf16.gmra.mrb[0].mxu0 %v345
      %v543 = vpop.f32.mrb[0].mxu0
      %v544 = vadd.f32 %v303, %v543
      %v545 = vpop.f32.mrb[0].mxu0
      %v546 = vpop.f32.mrb[0].mxu0
      %v547 = vadd.f32 %v303, %v546
      %v548 = vpop.f32.mrb[0].mxu0
      %549 = vmatprep.mubr.bf16.mxu0 0
      %550 = vmatmul.mubr.bf16.gmra.mrb[0].mxu0 %v348
      %v551 = vpop.f32.mrb[0].mxu0
      %v552 = vadd.f32 %v303, %v551
      %v553 = vpop.f32.mrb[0].mxu0
      %v554 = vpop.f32.mrb[0].mxu0
      %v555 = vadd.f32 %v303, %v554
      %v556 = vpop.f32.mrb[0].mxu0
      %557 = vmatprep.mubr.bf16.mxu0 0
      %558 = vmatmul.mubr.bf16.gmra.mrb[0].mxu0 %v351
      %v559 = vpop.f32.mrb[0].mxu0
      %v560 = vadd.f32 %v303, %v559
      %v561 = vpop.f32.mrb[0].mxu0
      %v562 = vpop.f32.mrb[0].mxu0
      %v563 = vadd.f32 %v303, %v562
      %v564 = vpop.f32.mrb[0].mxu0
      %565 = vmatprep.mubr.bf16.mxu0 0
      %566 = vmatmul.mubr.bf16.gmra.mrb[0].mxu0 %v354
      %v567 = vpop.f32.mrb[0].mxu0
      %v568 = vadd.f32 %v303, %v567
      %v569 = vpop.f32.mrb[0].mxu0
      %v570 = vpop.f32.mrb[0].mxu0
      %v571 = vadd.f32 %v303, %v570
      %v572 = vpop.f32.mrb[0].mxu0
      %573 = vmatprep.mubr.bf16.mxu0 0
      %574 = vmatmul.mubr.bf16.gmra.mrb[0].mxu0 %v357
      %v575 = vpop.f32.mrb[0].mxu0
      %v576 = vadd.f32 %v303, %v575
      %v577 = vpop.f32.mrb[0].mxu0
      %v578 = vpop.f32.mrb[0].mxu0
      %v579 = vadd.f32 %v303, %v578
      %v580 = vpop.f32.mrb[0].mxu0
      %581 = vmatprep.mubr.bf16.mxu0 0
      %582 = vmatmul.mubr.bf16.gmra.mrb[0].mxu0 %v360
      %v583 = vpop.f32.mrb[0].mxu0
      %v584 = vadd.f32 %v303, %v583
      %v585 = vpop.f32.mrb[0].mxu0
      %v586 = vpop.f32.mrb[0].mxu0
      %v587 = vadd.f32 %v303, %v586
      %v588 = vpop.f32.mrb[0].mxu0
      %589 = vmatprep.mubr.bf16.mxu0 0
      %590 = vmatmul.mubr.bf16.gmra.mrb[0].mxu0 %v363
      %v591 = vpop.f32.mrb[0].mxu0
      %v592 = vadd.f32 %v303, %v591
      %v593 = vpop.f32.mrb[0].mxu0
      %v594 = vpop.f32.mrb[0].mxu0
      %v595 = vadd.f32 %v303, %v594
      %v596 = vpop.f32.mrb[0].mxu0
      %597 = vmatprep.mubr.bf16.mxu0 0
      %598 = vmatmul.mubr.bf16.gmra.mrb[0].mxu0 %v366
      %v599 = vpop.f32.mrb[0].mxu0
      %v600 = vadd.f32 %v303, %v599
      %v601 = vpop.f32.mrb[0].mxu0
      %v602 = vpop.f32.mrb[0].mxu0
      %v603 = vadd.f32 %v303, %v602
      %v604 = vpop.f32.mrb[0].mxu0
      %605 = vmatprep.mubr.bf16.mxu0 0
      %606 = vmatmul.mubr.bf16.gmra.mrb[0].mxu0 %v369
      %v607 = vpop.f32.mrb[0].mxu0
      %v608 = vadd.f32 %v303, %v607
      %v609 = vpop.f32.mrb[0].mxu0
      %v610 = vpop.f32.mrb[0].mxu0
      %v611 = vadd.f32 %v303, %v610
      %v612 = vpop.f32.mrb[0].mxu0
      %613 = vmatprep.mubr.bf16.mxu0 0
      %614 = vmatmul.mubr.bf16.gmra.mrb[0].mxu0 %v372
      %v615 = vpop.f32.mrb[0].mxu0
      %v616 = vadd.f32 %v303, %v615
      %v617 = vpop.f32.mrb[0].mxu0
      %v618 = vpop.f32.mrb[0].mxu0
      %v619 = vadd.f32 %v303, %v618
      %v620 = vpop.f32.mrb[0].mxu0
      %621 = vmatprep.mubr.bf16.mxu0 0
      %622 = vmatmul.mubr.bf16.gmra.mrb[0].mxu0 %v375
      %v623 = vpop.f32.mrb[0].mxu0
      %v624 = vadd.f32 %v303, %v623
      %v625 = vpop.f32.mrb[0].mxu0
      %v626 = vpop.f32.mrb[0].mxu0
      %v627 = vadd.f32 %v303, %v626
      %v628 = vpop.f32.mrb[0].mxu0
      %629 = vmatprep.mubr.bf16.mxu0 0
      %630 = vmatmul.mubr.bf16.gmra.mrb[0].mxu0 %v378
      %v631 = vpop.f32.mrb[0].mxu0
      %v632 = vadd.f32 %v303, %v631
      %v633 = vpop.f32.mrb[0].mxu0
      %v634 = vpop.f32.mrb[0].mxu0
      %v635 = vadd.f32 %v303, %v634
      %v636 = vpop.f32.mrb[0].mxu0
      %637 = vmatprep.mubr.bf16.mxu0 0
      %638 = vmatmul.mubr.bf16.gmra.mrb[0].mxu0 %v381
      %v639 = vpop.f32.mrb[0].mxu0
      %v640 = vadd.f32 %v303, %v639
      %v641 = vpop.f32.mrb[0].mxu0
      %v642 = vpop.f32.mrb[0].mxu0
      %v643 = vadd.f32 %v303, %v642
      %v644 = vpop.f32.mrb[0].mxu0
      %645 = vmatprep.mubr.bf16.mxu0 0
      %646 = vmatmul.mubr.bf16.gmra.mrb[0].mxu0 %v384
      %v647 = vpop.f32.mrb[0].mxu0
      %v648 = vadd.f32 %v303, %v647
      %v649 = vpop.f32.mrb[0].mxu0
      %v650 = vpop.f32.mrb[0].mxu0
      %v651 = vadd.f32 %v303, %v650
      %v652 = vpop.f32.mrb[0].mxu0
      %653 = vmatprep.mubr.bf16.mxu0 0
      %654 = vmatmul.mubr.bf16.gmra.mrb[0].mxu0 %v387
      %v655 = vpop.f32.mrb[0].mxu0
      %v656 = vadd.f32 %v303, %v655
      %v657 = vpop.f32.mrb[0].mxu0
      %v658 = vpop.f32.mrb[0].mxu0
      %v659 = vadd.f32 %v303, %v658
      %v660 = vpop.f32.mrb[0].mxu0
      %661 = vmatprep.mubr.bf16.mxu0 0
      %662 = vmatmul.mubr.bf16.gmra.mrb[0].mxu0 %v390
      %v663 = vpop.f32.mrb[0].mxu0
      %v664 = vadd.f32 %v303, %v663
      %v665 = vpop.f32.mrb[0].mxu0
      %v666 = vpop.f32.mrb[0].mxu0
      %v667 = vadd.f32 %v303, %v666
      %v668 = vpop.f32.mrb[0].mxu0
      %669 = vmatprep.mubr.bf16.mxu0 0
      %670 = vmatmul.mubr.bf16.gmra.mrb[0].mxu0 %v393
      %v671 = vpop.f32.mrb[0].mxu0
      %v672 = vadd.f32 %v303, %v671
      %v673 = vpop.f32.mrb[0].mxu0
      %v674 = vpop.f32.mrb[0].mxu0
      %v675 = vadd.f32 %v303, %v674
      %v676 = vpop.f32.mrb[0].mxu0
      %677 = vmatprep.mubr.bf16.mxu0 0
      %678 = vmatmul.mubr.bf16.gmra.mrb[0].mxu0 %v396
      %v679 = vpop.f32.mrb[0].mxu0
      %v680 = vadd.f32 %v303, %v679
      %v681 = vpop.f32.mrb[0].mxu0
      %v682 = vpop.f32.mrb[0].mxu0
      %v683 = vadd.f32 %v303, %v682
      %v684 = vpop.f32.mrb[0].mxu0
      %685 = vmatprep.mubr.bf16.mxu0 0
      %686 = vmatmul.mubr.bf16.gmra.mrb[0].mxu0 %v399
      %v687 = vpop.f32.mrb[0].mxu0
      %v688 = vadd.f32 %v303, %v687
      %v689 = vpop.f32.mrb[0].mxu0
      %v690 = vpop.f32.mrb[0].mxu0
      %v691 = vadd.f32 %v303, %v690
      %v692 = vpop.f32.mrb[0].mxu0
      %693 = vdwg.mxu0
      %v694 = vmax.f32 %v440, 0.0
      %v695 = vmax.f32 %v443, 0.0
      %v696 = vmax.f32 %v448, 0.0
      %v697 = vmax.f32 %v451, 0.0
      %v698 = vmax.f32 %v456, 0.0
      %v699 = vmax.f32 %v459, 0.0
      %v700 = vmax.f32 %v464, 0.0
      %v701 = vmax.f32 %v467, 0.0
      %v702 = vmax.f32 %v472, 0.0
      %v703 = vmax.f32 %v475, 0.0
      %v704 = vmax.f32 %v480, 0.0
      %v705 = vmax.f32 %v483, 0.0
      %v706 = vmax.f32 %v488, 0.0
      %v707 = vmax.f32 %v491, 0.0
      %v708 = vmax.f32 %v496, 0.0
      %v709 = vmax.f32 %v499, 0.0
      %v710 = vmax.f32 %v504, 0.0
      %v711 = vmax.f32 %v507, 0.0
      %v712 = vmax.f32 %v512, 0.0
      %v713 = vmax.f32 %v515, 0.0
      %v714 = vmax.f32 %v520, 0.0
      %v715 = vmax.f32 %v523, 0.0
      %v716 = vmax.f32 %v528, 0.0
      %v717 = vmax.f32 %v531, 0.0
      %v718 = vmax.f32 %v536, 0.0
      %v719 = vmax.f32 %v539, 0.0
      %v720 = vmax.f32 %v544, 0.0
      %v721 = vmax.f32 %v547, 0.0
      %v722 = vmax.f32 %v552, 0.0
      %v723 = vmax.f32 %v555, 0.0
      %v724 = vmax.f32 %v560, 0.0
      %v725 = vmax.f32 %v563, 0.0
      %v726 = vmax.f32 %v568, 0.0
      %v727 = vmax.f32 %v571, 0.0
      %v728 = vmax.f32 %v576, 0.0
      %v729 = vmax.f32 %v579, 0.0
      %v730 = vmax.f32 %v584, 0.0
      %v731 = vmax.f32 %v587, 0.0
      %v732 = vmax.f32 %v592, 0.0
      %v733 = vmax.f32 %v595, 0.0
      %v734 = vmax.f32 %v600, 0.0
      %v735 = vmax.f32 %v603, 0.0
      %v736 = vmax.f32 %v608, 0.0
      %v737 = vmax.f32 %v611, 0.0
      %v738 = vmax.f32 %v616, 0.0
      %v739 = vmax.f32 %v619, 0.0
      %v740 = vmax.f32 %v624, 0.0
      %v741 = vmax.f32 %v627, 0.0
      %v742 = vmax.f32 %v632, 0.0
      %v743 = vmax.f32 %v635, 0.0
      %v744 = vmax.f32 %v640, 0.0
      %v745 = vmax.f32 %v643, 0.0
      %v746 = vmax.f32 %v648, 0.0
      %v747 = vmax.f32 %v651, 0.0
      %v748 = vmax.f32 %v656, 0.0
      %v749 = vmax.f32 %v659, 0.0
      %v750 = vmax.f32 %v664, 0.0
      %v751 = vmax.f32 %v667, 0.0
      %v752 = vmax.f32 %v672, 0.0
      %v753 = vmax.f32 %v675, 0.0
      %v754 = vmax.f32 %v680, 0.0
      %v755 = vmax.f32 %v683, 0.0
      %v756 = vmax.f32 %v688, 0.0
      %v757 = vmax.f32 %v691, 0.0
      %v758 = vpack.c.bf16 %v695, %v694
      %v759 = vpack.c.bf16 %v697, %v696
      %v760 = vpack.c.bf16 %v699, %v698
      %v761 = vpack.c.bf16 %v701, %v700
      %v762 = vpack.c.bf16 %v703, %v702
      %v763 = vpack.c.bf16 %v705, %v704
      %v764 = vpack.c.bf16 %v707, %v706
      %v765 = vpack.c.bf16 %v709, %v708
      %v766 = vpack.c.bf16 %v711, %v710
      %v767 = vpack.c.bf16 %v713, %v712
      %v768 = vpack.c.bf16 %v715, %v714
      %v769 = vpack.c.bf16 %v717, %v716
      %v770 = vpack.c.bf16 %v719, %v718
      %v771 = vpack.c.bf16 %v721, %v720
      %v772 = vpack.c.bf16 %v723, %v722
      %v773 = vpack.c.bf16 %v725, %v724
      %v774 = vpack.c.bf16 %v727, %v726
      %v775 = vpack.c.bf16 %v729, %v728
      %v776 = vpack.c.bf16 %v731, %v730
      %v777 = vpack.c.bf16 %v733, %v732
      %v778 = vpack.c.bf16 %v735, %v734
      %v779 = vpack.c.bf16 %v737, %v736
      %v780 = vpack.c.bf16 %v739, %v738
      %v781 = vpack.c.bf16 %v741, %v740
      %v782 = vpack.c.bf16 %v743, %v742
      %v783 = vpack.c.bf16 %v745, %v744
      %v784 = vpack.c.bf16 %v747, %v746
      %v785 = vpack.c.bf16 %v749, %v748
      %v786 = vpack.c.bf16 %v751, %v750
      %v787 = vpack.c.bf16 %v753, %v752
      %v788 = vpack.c.bf16 %v755, %v754
      %v789 = vpack.c.bf16 %v757, %v756
      %v790 = vld [vmem:[%s2] sm:$0xf]
      %v791 = vld [vmem:[%s2 + $0x8] sm:$0xf]
      %v792 = vld [vmem:[%s2 + $0x10] sm:$0xf]
      %v793 = vld [vmem:[%s2 + $0x18] sm:$0xf]
      %v794 = vld [vmem:[%s2 + $0x20] sm:$0xf]
      %v795 = vld [vmem:[%s2 + $0x28] sm:$0xf]
      %v796 = vld [vmem:[%s2 + $0x30] sm:$0xf]
      %v797 = vld [vmem:[%s2 + $0x38] sm:$0xf]
      %v798 = vld [vmem:[%s2 + $0x40] sm:$0xf]
      %v799 = vld [vmem:[%s2 + $0x48] sm:$0xf]
      %v800 = vld [vmem:[%s2 + $0x50] sm:$0xf]
      %v801 = vld [vmem:[%s2 + $0x58] sm:$0xf]
      %v802 = vld [vmem:[%s2 + $0x60] sm:$0xf]
      %v803 = vld [vmem:[%s2 + $0x68] sm:$0xf]
      %v804 = vld [vmem:[%s2 + $0x70] sm:$0xf]
      %v805 = vld [vmem:[%s2 + $0x78] sm:$0xf]
      %v806 = vld [vmem:[%s3 + $0x1] sm:$0x1]
      %v807 = vlaneseq
      %v808 = vshrl.u32 %v807, 7
      %v809 = vsub.s32 0, %v808
      %v810 = vrot.slane %v806, %v809
      %v827 = vunpack.c.l.b16 %v790
      %v828 = vunpack.c.l.b16 %v791
      %v829 = vunpack.c.l.b16 %v792
      %v830 = vunpack.c.l.b16 %v793
      %v831 = vunpack.c.l.b16 %v794
      %v832 = vunpack.c.l.b16 %v795
      %v833 = vunpack.c.l.b16 %v796
      %v834 = vunpack.c.l.b16 %v797
      %v835 = vunpack.c.l.b16 %v798
      %v836 = vunpack.c.l.b16 %v799
      %v837 = vunpack.c.l.b16 %v800
      %v838 = vunpack.c.l.b16 %v801
      %v839 = vunpack.c.l.b16 %v802
      %v840 = vunpack.c.l.b16 %v803
      %v841 = vunpack.c.l.b16 %v804
      %v842 = vunpack.c.l.b16 %v805
      %v843 = vpack.c.b16 %v828, %v827
      %v844 = vpack.c.b16 %v830, %v829
      %v845 = vpack.c.b16 %v832, %v831
      %v846 = vpack.c.b16 %v834, %v833
      %v847 = vpack.c.b16 %v836, %v835
      %v848 = vpack.c.b16 %v838, %v837
      %v849 = vpack.c.b16 %v840, %v839
      %v850 = vpack.c.b16 %v842, %v841
      %859 = vmatprep.subr.bf16.mxu0 0
      %860 = vmatpush1.bf16.msra.mxu0 %v843
      %861 = vmatprep.subr.bf16.mxu0 0
      %862 = vmatpush1.bf16.msra.mxu0 %v844
      %863 = vmatprep.subr.bf16.mxu0 0
      %864 = vmatpush1.bf16.msra.mxu0 %v845
      %865 = vmatprep.subr.bf16.mxu0 0
      %866 = vmatpush1.bf16.msra.mxu0 %v846
      %867 = vmatprep.subr.bf16.mxu0 0
      %868 = vmatpush1.bf16.msra.mxu0 %v847
      %869 = vmatprep.subr.bf16.mxu0 0
      %870 = vmatpush1.bf16.msra.mxu0 %v848
      %871 = vmatprep.subr.bf16.mxu0 0
      %872 = vmatpush1.bf16.msra.mxu0 %v849
      %873 = vmatprep.subr.bf16.mxu0 0
      %874 = vmatpush1.bf16.msra.mxu0 %v850
      %875 = vmatprep.subr.bf16.mxu0 0
      %876 = vmatpush1.bf16.msra.mxu0 0
      %877 = vmatprep.subr.bf16.mxu0 0
      %878 = vmatpush1.bf16.msra.mxu0 0
      %879 = vmatprep.subr.bf16.mxu0 0
      %880 = vmatpush1.bf16.msra.mxu0 0
      %881 = vmatprep.subr.bf16.mxu0 0
      %882 = vmatpush1.bf16.msra.mxu0 0
      %883 = vmatprep.subr.bf16.mxu0 0
      %884 = vmatpush1.bf16.msra.mxu0 0
      %885 = vmatprep.subr.bf16.mxu0 0
      %886 = vmatpush1.bf16.msra.mxu0 0
      %887 = vmatprep.subr.bf16.mxu0 0
      %888 = vmatpush1.bf16.msra.mxu0 0
      %889 = vmatprep.subr.bf16.mxu0 0
      %890 = vmatpush1.bf16.msra.mxu0 0
      %891 = vmatprep.mubr.bf16.mxu0 0
      %892 = vmatmul.mubr.bf16.gmra.mrb[0].mxu0 %v758
      %v893 = vpop.f32.mrb[0].mxu0
      %v894 = vadd.f32 %v810, %v893
      %v895 = vpop.f32.mrb[0].mxu0
      %v896 = vpop.f32.mrb[0].mxu0
      %v897 = vadd.f32 %v810, %v896
      %v898 = vpop.f32.mrb[0].mxu0
      %899 = vmatprep.mubr.bf16.mxu0 0
      %900 = vmatmul.mubr.bf16.gmra.mrb[0].mxu0 %v759
      %v901 = vpop.f32.mrb[0].mxu0
      %v902 = vadd.f32 %v810, %v901
      %v903 = vpop.f32.mrb[0].mxu0
      %v904 = vpop.f32.mrb[0].mxu0
      %v905 = vadd.f32 %v810, %v904
      %v906 = vpop.f32.mrb[0].mxu0
      %907 = vmatprep.mubr.bf16.mxu0 0
      %908 = vmatmul.mubr.bf16.gmra.mrb[0].mxu0 %v760
      %v909 = vpop.f32.mrb[0].mxu0
      %v910 = vadd.f32 %v810, %v909
      %v911 = vpop.f32.mrb[0].mxu0
      %v912 = vpop.f32.mrb[0].mxu0
      %v913 = vadd.f32 %v810, %v912
      %v914 = vpop.f32.mrb[0].mxu0
      %915 = vmatprep.mubr.bf16.mxu0 0
      %916 = vmatmul.mubr.bf16.gmra.mrb[0].mxu0 %v761
      %v917 = vpop.f32.mrb[0].mxu0
      %v918 = vadd.f32 %v810, %v917
      %v919 = vpop.f32.mrb[0].mxu0
      %v920 = vpop.f32.mrb[0].mxu0
      %v921 = vadd.f32 %v810, %v920
      %v922 = vpop.f32.mrb[0].mxu0
      %923 = vmatprep.mubr.bf16.mxu0 0
      %924 = vmatmul.mubr.bf16.gmra.mrb[0].mxu0 %v762
      %v925 = vpop.f32.mrb[0].mxu0
      %v926 = vadd.f32 %v810, %v925
      %v927 = vpop.f32.mrb[0].mxu0
      %v928 = vpop.f32.mrb[0].mxu0
      %v929 = vadd.f32 %v810, %v928
      %v930 = vpop.f32.mrb[0].mxu0
      %931 = vmatprep.mubr.bf16.mxu0 0
      %932 = vmatmul.mubr.bf16.gmra.mrb[0].mxu0 %v763
      %v933 = vpop.f32.mrb[0].mxu0
      %v934 = vadd.f32 %v810, %v933
      %v935 = vpop.f32.mrb[0].mxu0
      %v936 = vpop.f32.mrb[0].mxu0
      %v937 = vadd.f32 %v810, %v936
      %v938 = vpop.f32.mrb[0].mxu0
      %939 = vmatprep.mubr.bf16.mxu0 0
      %940 = vmatmul.mubr.bf16.gmra.mrb[0].mxu0 %v764
      %v941 = vpop.f32.mrb[0].mxu0
      %v942 = vadd.f32 %v810, %v941
      %v943 = vpop.f32.mrb[0].mxu0
      %v944 = vpop.f32.mrb[0].mxu0
      %v945 = vadd.f32 %v810, %v944
      %v946 = vpop.f32.mrb[0].mxu0
      %947 = vmatprep.mubr.bf16.mxu0 0
      %948 = vmatmul.mubr.bf16.gmra.mrb[0].mxu0 %v765
      %v949 = vpop.f32.mrb[0].mxu0
      %v950 = vadd.f32 %v810, %v949
      %v951 = vpop.f32.mrb[0].mxu0
      %v952 = vpop.f32.mrb[0].mxu0
      %v953 = vadd.f32 %v810, %v952
      %v954 = vpop.f32.mrb[0].mxu0
      %955 = vmatprep.mubr.bf16.mxu0 0
      %956 = vmatmul.mubr.bf16.gmra.mrb[0].mxu0 %v766
      %v957 = vpop.f32.mrb[0].mxu0
      %v958 = vadd.f32 %v810, %v957
      %v959 = vpop.f32.mrb[0].mxu0
      %v960 = vpop.f32.mrb[0].mxu0
      %v961 = vadd.f32 %v810, %v960
      %v962 = vpop.f32.mrb[0].mxu0
      %963 = vmatprep.mubr.bf16.mxu0 0
      %964 = vmatmul.mubr.bf16.gmra.mrb[0].mxu0 %v767
      %v965 = vpop.f32.mrb[0].mxu0
      %v966 = vadd.f32 %v810, %v965
      %v967 = vpop.f32.mrb[0].mxu0
      %v968 = vpop.f32.mrb[0].mxu0
      %v969 = vadd.f32 %v810, %v968
      %v970 = vpop.f32.mrb[0].mxu0
      %971 = vmatprep.mubr.bf16.mxu0 0
      %972 = vmatmul.mubr.bf16.gmra.mrb[0].mxu0 %v768
      %v973 = vpop.f32.mrb[0].mxu0
      %v974 = vadd.f32 %v810, %v973
      %v975 = vpop.f32.mrb[0].mxu0
      %v976 = vpop.f32.mrb[0].mxu0
      %v977 = vadd.f32 %v810, %v976
      %v978 = vpop.f32.mrb[0].mxu0
      %979 = vmatprep.mubr.bf16.mxu0 0
      %980 = vmatmul.mubr.bf16.gmra.mrb[0].mxu0 %v769
      %v981 = vpop.f32.mrb[0].mxu0
      %v982 = vadd.f32 %v810, %v981
      %v983 = vpop.f32.mrb[0].mxu0
      %v984 = vpop.f32.mrb[0].mxu0
      %v985 = vadd.f32 %v810, %v984
      %v986 = vpop.f32.mrb[0].mxu0
      %987 = vmatprep.mubr.bf16.mxu0 0
      %988 = vmatmul.mubr.bf16.gmra.mrb[0].mxu0 %v770
      %v989 = vpop.f32.mrb[0].mxu0
      %v990 = vadd.f32 %v810, %v989
      %v991 = vpop.f32.mrb[0].mxu0
      %v992 = vpop.f32.mrb[0].mxu0
      %v993 = vadd.f32 %v810, %v992
      %v994 = vpop.f32.mrb[0].mxu0
      %995 = vmatprep.mubr.bf16.mxu0 0
      %996 = vmatmul.mubr.bf16.gmra.mrb[0].mxu0 %v771
      %v997 = vpop.f32.mrb[0].mxu0
      %v998 = vadd.f32 %v810, %v997
      %v999 = vpop.f32.mrb[0].mxu0
      %v1000 = vpop.f32.mrb[0].mxu0
      %v1001 = vadd.f32 %v810, %v1000
      %v1002 = vpop.f32.mrb[0].mxu0
      %1003 = vmatprep.mubr.bf16.mxu0 0
      %1004 = vmatmul.mubr.bf16.gmra.mrb[0].mxu0 %v772
      %v1005 = vpop.f32.mrb[0].mxu0
      %v1006 = vadd.f32 %v810, %v1005
      %v1007 = vpop.f32.mrb[0].mxu0
      %v1008 = vpop.f32.mrb[0].mxu0
      %v1009 = vadd.f32 %v810, %v1008
      %v1010 = vpop.f32.mrb[0].mxu0
      %1011 = vmatprep.mubr.bf16.mxu0 0
      %1012 = vmatmul.mubr.bf16.gmra.mrb[0].mxu0 %v773
      %v1013 = vpop.f32.mrb[0].mxu0
      %v1014 = vadd.f32 %v810, %v1013
      %v1015 = vpop.f32.mrb[0].mxu0
      %v1016 = vpop.f32.mrb[0].mxu0
      %v1017 = vadd.f32 %v810, %v1016
      %v1018 = vpop.f32.mrb[0].mxu0
      %1019 = vmatprep.mubr.bf16.mxu0 0
      %1020 = vmatmul.mubr.bf16.gmra.mrb[0].mxu0 %v774
      %v1021 = vpop.f32.mrb[0].mxu0
      %v1022 = vadd.f32 %v810, %v1021
      %v1023 = vpop.f32.mrb[0].mxu0
      %v1024 = vpop.f32.mrb[0].mxu0
      %v1025 = vadd.f32 %v810, %v1024
      %v1026 = vpop.f32.mrb[0].mxu0
      %1027 = vmatprep.mubr.bf16.mxu0 0
      %1028 = vmatmul.mubr.bf16.gmra.mrb[0].mxu0 %v775
      %v1029 = vpop.f32.mrb[0].mxu0
      %v1030 = vadd.f32 %v810, %v1029
      %v1031 = vpop.f32.mrb[0].mxu0
      %v1032 = vpop.f32.mrb[0].mxu0
      %v1033 = vadd.f32 %v810, %v1032
      %v1034 = vpop.f32.mrb[0].mxu0
      %1035 = vmatprep.mubr.bf16.mxu0 0
      %1036 = vmatmul.mubr.bf16.gmra.mrb[0].mxu0 %v776
      %v1037 = vpop.f32.mrb[0].mxu0
      %v1038 = vadd.f32 %v810, %v1037
      %v1039 = vpop.f32.mrb[0].mxu0
      %v1040 = vpop.f32.mrb[0].mxu0
      %v1041 = vadd.f32 %v810, %v1040
      %v1042 = vpop.f32.mrb[0].mxu0
      %1043 = vmatprep.mubr.bf16.mxu0 0
      %1044 = vmatmul.mubr.bf16.gmra.mrb[0].mxu0 %v777
      %v1045 = vpop.f32.mrb[0].mxu0
      %v1046 = vadd.f32 %v810, %v1045
      %v1047 = vpop.f32.mrb[0].mxu0
      %v1048 = vpop.f32.mrb[0].mxu0
      %v1049 = vadd.f32 %v810, %v1048
      %v1050 = vpop.f32.mrb[0].mxu0
      %1051 = vmatprep.mubr.bf16.mxu0 0
      %1052 = vmatmul.mubr.bf16.gmra.mrb[0].mxu0 %v778
      %v1053 = vpop.f32.mrb[0].mxu0
      %v1054 = vadd.f32 %v810, %v1053
      %v1055 = vpop.f32.mrb[0].mxu0
      %v1056 = vpop.f32.mrb[0].mxu0
      %v1057 = vadd.f32 %v810, %v1056
      %v1058 = vpop.f32.mrb[0].mxu0
      %1059 = vmatprep.mubr.bf16.mxu0 0
      %1060 = vmatmul.mubr.bf16.gmra.mrb[0].mxu0 %v779
      %v1061 = vpop.f32.mrb[0].mxu0
      %v1062 = vadd.f32 %v810, %v1061
      %v1063 = vpop.f32.mrb[0].mxu0
      %v1064 = vpop.f32.mrb[0].mxu0
      %v1065 = vadd.f32 %v810, %v1064
      %v1066 = vpop.f32.mrb[0].mxu0
      %1067 = vmatprep.mubr.bf16.mxu0 0
      %1068 = vmatmul.mubr.bf16.gmra.mrb[0].mxu0 %v780
      %v1069 = vpop.f32.mrb[0].mxu0
      %v1070 = vadd.f32 %v810, %v1069
      %v1071 = vpop.f32.mrb[0].mxu0
      %v1072 = vpop.f32.mrb[0].mxu0
      %v1073 = vadd.f32 %v810, %v1072
      %v1074 = vpop.f32.mrb[0].mxu0
      %1075 = vmatprep.mubr.bf16.mxu0 0
      %1076 = vmatmul.mubr.bf16.gmra.mrb[0].mxu0 %v781
      %v1077 = vpop.f32.mrb[0].mxu0
      %v1078 = vadd.f32 %v810, %v1077
      %v1079 = vpop.f32.mrb[0].mxu0
      %v1080 = vpop.f32.mrb[0].mxu0
      %v1081 = vadd.f32 %v810, %v1080
      %v1082 = vpop.f32.mrb[0].mxu0
      %1083 = vmatprep.mubr.bf16.mxu0 0
      %1084 = vmatmul.mubr.bf16.gmra.mrb[0].mxu0 %v782
      %v1085 = vpop.f32.mrb[0].mxu0
      %v1086 = vadd.f32 %v810, %v1085
      %v1087 = vpop.f32.mrb[0].mxu0
      %v1088 = vpop.f32.mrb[0].mxu0
      %v1089 = vadd.f32 %v810, %v1088
      %v1090 = vpop.f32.mrb[0].mxu0
      %1091 = vmatprep.mubr.bf16.mxu0 0
      %1092 = vmatmul.mubr.bf16.gmra.mrb[0].mxu0 %v783
      %v1093 = vpop.f32.mrb[0].mxu0
      %v1094 = vadd.f32 %v810, %v1093
      %v1095 = vpop.f32.mrb[0].mxu0
      %v1096 = vpop.f32.mrb[0].mxu0
      %v1097 = vadd.f32 %v810, %v1096
      %v1098 = vpop.f32.mrb[0].mxu0
      %1099 = vmatprep.mubr.bf16.mxu0 0
      %1100 = vmatmul.mubr.bf16.gmra.mrb[0].mxu0 %v784
      %v1101 = vpop.f32.mrb[0].mxu0
      %v1102 = vadd.f32 %v810, %v1101
      %v1103 = vpop.f32.mrb[0].mxu0
      %v1104 = vpop.f32.mrb[0].mxu0
      %v1105 = vadd.f32 %v810, %v1104
      %v1106 = vpop.f32.mrb[0].mxu0
      %1107 = vmatprep.mubr.bf16.mxu0 0
      %1108 = vmatmul.mubr.bf16.gmra.mrb[0].mxu0 %v785
      %v1109 = vpop.f32.mrb[0].mxu0
      %v1110 = vadd.f32 %v810, %v1109
      %v1111 = vpop.f32.mrb[0].mxu0
      %v1112 = vpop.f32.mrb[0].mxu0
      %v1113 = vadd.f32 %v810, %v1112
      %v1114 = vpop.f32.mrb[0].mxu0
      %1115 = vmatprep.mubr.bf16.mxu0 0
      %1116 = vmatmul.mubr.bf16.gmra.mrb[0].mxu0 %v786
      %v1117 = vpop.f32.mrb[0].mxu0
      %v1118 = vadd.f32 %v810, %v1117
      %v1119 = vpop.f32.mrb[0].mxu0
      %v1120 = vpop.f32.mrb[0].mxu0
      %v1121 = vadd.f32 %v810, %v1120
      %v1122 = vpop.f32.mrb[0].mxu0
      %1123 = vmatprep.mubr.bf16.mxu0 0
      %1124 = vmatmul.mubr.bf16.gmra.mrb[0].mxu0 %v787
      %v1125 = vpop.f32.mrb[0].mxu0
      %v1126 = vadd.f32 %v810, %v1125
      %v1127 = vpop.f32.mrb[0].mxu0
      %v1128 = vpop.f32.mrb[0].mxu0
      %v1129 = vadd.f32 %v810, %v1128
      %v1130 = vpop.f32.mrb[0].mxu0
      %1131 = vmatprep.mubr.bf16.mxu0 0
      %1132 = vmatmul.mubr.bf16.gmra.mrb[0].mxu0 %v788
      %v1133 = vpop.f32.mrb[0].mxu0
      %v1134 = vadd.f32 %v810, %v1133
      %v1135 = vpop.f32.mrb[0].mxu0
      %v1136 = vpop.f32.mrb[0].mxu0
      %v1137 = vadd.f32 %v810, %v1136
      %v1138 = vpop.f32.mrb[0].mxu0
      %1139 = vmatprep.mubr.bf16.mxu0 0
      %1140 = vmatmul.mubr.bf16.gmra.mrb[0].mxu0 %v789
      %v1141 = vpop.f32.mrb[0].mxu0
      %v1142 = vadd.f32 %v810, %v1141
      %v1143 = vpop.f32.mrb[0].mxu0
      %v1144 = vpop.f32.mrb[0].mxu0
      %v1145 = vadd.f32 %v810, %v1144
      %v1146 = vpop.f32.mrb[0].mxu0
      %1147 = vdwg.mxu0
      %v1148 = vmax.f32 %v894, 0.0
      %v1149 = vmax.f32 %v897, 0.0
      %v1150 = vmax.f32 %v902, 0.0
      %v1151 = vmax.f32 %v905, 0.0
      %v1152 = vmax.f32 %v910, 0.0
      %v1153 = vmax.f32 %v913, 0.0
      %v1154 = vmax.f32 %v918, 0.0
      %v1155 = vmax.f32 %v921, 0.0
      %v1156 = vmax.f32 %v926, 0.0
      %v1157 = vmax.f32 %v929, 0.0
      %v1158 = vmax.f32 %v934, 0.0
      %v1159 = vmax.f32 %v937, 0.0
      %v1160 = vmax.f32 %v942, 0.0
      %v1161 = vmax.f32 %v945, 0.0
      %v1162 = vmax.f32 %v950, 0.0
      %v1163 = vmax.f32 %v953, 0.0
      %v1164 = vmax.f32 %v958, 0.0
      %v1165 = vmax.f32 %v961, 0.0
      %v1166 = vmax.f32 %v966, 0.0
      %v1167 = vmax.f32 %v969, 0.0
      %v1168 = vmax.f32 %v974, 0.0
      %v1169 = vmax.f32 %v977, 0.0
      %v1170 = vmax.f32 %v982, 0.0
      %v1171 = vmax.f32 %v985, 0.0
      %v1172 = vmax.f32 %v990, 0.0
      %v1173 = vmax.f32 %v993, 0.0
      %v1174 = vmax.f32 %v998, 0.0
      %v1175 = vmax.f32 %v1001, 0.0
      %v1176 = vmax.f32 %v1006, 0.0
      %v1177 = vmax.f32 %v1009, 0.0
      %v1178 = vmax.f32 %v1014, 0.0
      %v1179 = vmax.f32 %v1017, 0.0
      %v1180 = vmax.f32 %v1022, 0.0
      %v1181 = vmax.f32 %v1025, 0.0
      %v1182 = vmax.f32 %v1030, 0.0
      %v1183 = vmax.f32 %v1033, 0.0
      %v1184 = vmax.f32 %v1038, 0.0
      %v1185 = vmax.f32 %v1041, 0.0
      %v1186 = vmax.f32 %v1046, 0.0
      %v1187 = vmax.f32 %v1049, 0.0
      %v1188 = vmax.f32 %v1054, 0.0
      %v1189 = vmax.f32 %v1057, 0.0
      %v1190 = vmax.f32 %v1062, 0.0
      %v1191 = vmax.f32 %v1065, 0.0
      %v1192 = vmax.f32 %v1070, 0.0
      %v1193 = vmax.f32 %v1073, 0.0
      %v1194 = vmax.f32 %v1078, 0.0
      %v1195 = vmax.f32 %v1081, 0.0
      %v1196 = vmax.f32 %v1086, 0.0
      %v1197 = vmax.f32 %v1089, 0.0
      %v1198 = vmax.f32 %v1094, 0.0
      %v1199 = vmax.f32 %v1097, 0.0
      %v1200 = vmax.f32 %v1102, 0.0
      %v1201 = vmax.f32 %v1105, 0.0
      %v1202 = vmax.f32 %v1110, 0.0
      %v1203 = vmax.f32 %v1113, 0.0
      %v1204 = vmax.f32 %v1118, 0.0
      %v1205 = vmax.f32 %v1121, 0.0
      %v1206 = vmax.f32 %v1126, 0.0
      %v1207 = vmax.f32 %v1129, 0.0
      %v1208 = vmax.f32 %v1134, 0.0
      %v1209 = vmax.f32 %v1137, 0.0
      %v1210 = vmax.f32 %v1142, 0.0
      %v1211 = vmax.f32 %v1145, 0.0
      %v1212 = vpack.c.bf16 %v1149, %v1148
      %v1213 = vpack.c.bf16 %v1151, %v1150
      %v1214 = vpack.c.bf16 %v1153, %v1152
      %v1215 = vpack.c.bf16 %v1155, %v1154
      %v1216 = vpack.c.bf16 %v1157, %v1156
      %v1217 = vpack.c.bf16 %v1159, %v1158
      %v1218 = vpack.c.bf16 %v1161, %v1160
      %v1219 = vpack.c.bf16 %v1163, %v1162
      %v1220 = vpack.c.bf16 %v1165, %v1164
      %v1221 = vpack.c.bf16 %v1167, %v1166
      %v1222 = vpack.c.bf16 %v1169, %v1168
      %v1223 = vpack.c.bf16 %v1171, %v1170
      %v1224 = vpack.c.bf16 %v1173, %v1172
      %v1225 = vpack.c.bf16 %v1175, %v1174
      %v1226 = vpack.c.bf16 %v1177, %v1176
      %v1227 = vpack.c.bf16 %v1179, %v1178
      %v1228 = vpack.c.bf16 %v1181, %v1180
      %v1229 = vpack.c.bf16 %v1183, %v1182
      %v1230 = vpack.c.bf16 %v1185, %v1184
      %v1231 = vpack.c.bf16 %v1187, %v1186
      %v1232 = vpack.c.bf16 %v1189, %v1188
      %v1233 = vpack.c.bf16 %v1191, %v1190
      %v1234 = vpack.c.bf16 %v1193, %v1192
      %v1235 = vpack.c.bf16 %v1195, %v1194
      %v1236 = vpack.c.bf16 %v1197, %v1196
      %v1237 = vpack.c.bf16 %v1199, %v1198
      %v1238 = vpack.c.bf16 %v1201, %v1200
      %v1239 = vpack.c.bf16 %v1203, %v1202
      %v1240 = vpack.c.bf16 %v1205, %v1204
      %v1241 = vpack.c.bf16 %v1207, %v1206
      %v1242 = vpack.c.bf16 %v1209, %v1208
      %v1243 = vpack.c.bf16 %v1211, %v1210
      %v1244 = vld [vmem:[%s2 + $0x4] sm:$0xf]
      %v1245 = vld [vmem:[%s2 + $0xc] sm:$0xf]
      %v1246 = vld [vmem:[%s2 + $0x14] sm:$0xf]
      %v1247 = vld [vmem:[%s2 + $0x1c] sm:$0xf]
      %v1248 = vld [vmem:[%s2 + $0x24] sm:$0xf]
      %v1249 = vld [vmem:[%s2 + $0x2c] sm:$0xf]
      %v1250 = vld [vmem:[%s2 + $0x34] sm:$0xf]
      %v1251 = vld [vmem:[%s2 + $0x3c] sm:$0xf]
      %v1252 = vld [vmem:[%s2 + $0x44] sm:$0xf]
      %v1253 = vld [vmem:[%s2 + $0x4c] sm:$0xf]
      %v1254 = vld [vmem:[%s2 + $0x54] sm:$0xf]
      %v1255 = vld [vmem:[%s2 + $0x5c] sm:$0xf]
      %v1256 = vld [vmem:[%s2 + $0x64] sm:$0xf]
      %v1257 = vld [vmem:[%s2 + $0x6c] sm:$0xf]
      %v1258 = vld [vmem:[%s2 + $0x74] sm:$0xf]
      %v1259 = vld [vmem:[%s2 + $0x7c] sm:$0xf]
      %v1260 = vld [vmem:[%s3 + $0x2] sm:$0x1]
      %v1261 = vlaneseq
      %v1262 = vshrl.u32 %v1261, 7
      %v1263 = vsub.s32 0, %v1262
      %v1264 = vrot.slane %v1260, %v1263
      %v1281 = vunpack.c.l.b16 %v1244
      %v1282 = vunpack.c.l.b16 %v1245
      %v1283 = vunpack.c.l.b16 %v1246
      %v1284 = vunpack.c.l.b16 %v1247
      %v1285 = vunpack.c.l.b16 %v1248
      %v1286 = vunpack.c.l.b16 %v1249
      %v1287 = vunpack.c.l.b16 %v1250
      %v1288 = vunpack.c.l.b16 %v1251
      %v1289 = vunpack.c.l.b16 %v1252
      %v1290 = vunpack.c.l.b16 %v1253
      %v1291 = vunpack.c.l.b16 %v1254
      %v1292 = vunpack.c.l.b16 %v1255
      %v1293 = vunpack.c.l.b16 %v1256
      %v1294 = vunpack.c.l.b16 %v1257
      %v1295 = vunpack.c.l.b16 %v1258
      %v1296 = vunpack.c.l.b16 %v1259
      %v1297 = vpack.c.b16 %v1282, %v1281
      %v1298 = vpack.c.b16 %v1284, %v1283
      %v1299 = vpack.c.b16 %v1286, %v1285
      %v1300 = vpack.c.b16 %v1288, %v1287
      %v1301 = vpack.c.b16 %v1290, %v1289
      %v1302 = vpack.c.b16 %v1292, %v1291
      %v1303 = vpack.c.b16 %v1294, %v1293
      %v1304 = vpack.c.b16 %v1296, %v1295
      %1313 = vmatprep.subr.bf16.mxu0 0
      %1314 = vmatpush1.bf16.msra.mxu0 %v1297
      %1315 = vmatprep.subr.bf16.mxu0 0
      %1316 = vmatpush1.bf16.msra.mxu0 %v1298
      %1317 = vmatprep.subr.bf16.mxu0 0
      %1318 = vmatpush1.bf16.msra.mxu0 %v1299
      %1319 = vmatprep.subr.bf16.mxu0 0
      %1320 = vmatpush1.bf16.msra.mxu0 %v1300
      %1321 = vmatprep.subr.bf16.mxu0 0
      %1322 = vmatpush1.bf16.msra.mxu0 %v1301
      %1323 = vmatprep.subr.bf16.mxu0 0
      %1324 = vmatpush1.bf16.msra.mxu0 %v1302
      %1325 = vmatprep.subr.bf16.mxu0 0
      %1326 = vmatpush1.bf16.msra.mxu0 %v1303
      %1327 = vmatprep.subr.bf16.mxu0 0
      %1328 = vmatpush1.bf16.msra.mxu0 %v1304
      %1329 = vmatprep.subr.bf16.mxu0 0
      %1330 = vmatpush1.bf16.msra.mxu0 0
      %1331 = vmatprep.subr.bf16.mxu0 0
      %1332 = vmatpush1.bf16.msra.mxu0 0
      %1333 = vmatprep.subr.bf16.mxu0 0
      %1334 = vmatpush1.bf16.msra.mxu0 0
      %1335 = vmatprep.subr.bf16.mxu0 0
      %1336 = vmatpush1.bf16.msra.mxu0 0
      %1337 = vmatprep.subr.bf16.mxu0 0
      %1338 = vmatpush1.bf16.msra.mxu0 0
      %1339 = vmatprep.subr.bf16.mxu0 0
      %1340 = vmatpush1.bf16.msra.mxu0 0
      %1341 = vmatprep.subr.bf16.mxu0 0
      %1342 = vmatpush1.bf16.msra.mxu0 0
      %1343 = vmatprep.subr.bf16.mxu0 0
      %1344 = vmatpush1.bf16.msra.mxu0 0
      %1345 = vmatprep.mubr.bf16.mxu0 0
      %1346 = vmatmul.mubr.bf16.gmra.mrb[0].mxu0 %v1212
      %v1347 = vpop.f32.mrb[0].mxu0
      %v1348 = vadd.f32 %v1264, %v1347
      %v1349 = vpop.f32.mrb[0].mxu0
      %v1350 = vpop.f32.mrb[0].mxu0
      %v1351 = vadd.f32 %v1264, %v1350
      %v1352 = vpop.f32.mrb[0].mxu0
      %1353 = vmatprep.mubr.bf16.mxu0 0
      %1354 = vmatmul.mubr.bf16.gmra.mrb[0].mxu0 %v1213
      %v1355 = vpop.f32.mrb[0].mxu0
      %v1356 = vadd.f32 %v1264, %v1355
      %v1357 = vpop.f32.mrb[0].mxu0
      %v1358 = vpop.f32.mrb[0].mxu0
      %v1359 = vadd.f32 %v1264, %v1358
      %v1360 = vpop.f32.mrb[0].mxu0
      %1361 = vmatprep.mubr.bf16.mxu0 0
      %1362 = vmatmul.mubr.bf16.gmra.mrb[0].mxu0 %v1214
      %v1363 = vpop.f32.mrb[0].mxu0
      %v1364 = vadd.f32 %v1264, %v1363
      %v1365 = vpop.f32.mrb[0].mxu0
      %v1366 = vpop.f32.mrb[0].mxu0
      %v1367 = vadd.f32 %v1264, %v1366
      %v1368 = vpop.f32.mrb[0].mxu0
      %1369 = vmatprep.mubr.bf16.mxu0 0
      %1370 = vmatmul.mubr.bf16.gmra.mrb[0].mxu0 %v1215
      %v1371 = vpop.f32.mrb[0].mxu0
      %v1372 = vadd.f32 %v1264, %v1371
      %v1373 = vpop.f32.mrb[0].mxu0
      %v1374 = vpop.f32.mrb[0].mxu0
      %v1375 = vadd.f32 %v1264, %v1374
      %v1376 = vpop.f32.mrb[0].mxu0
      %1377 = vmatprep.mubr.bf16.mxu0 0
      %1378 = vmatmul.mubr.bf16.gmra.mrb[0].mxu0 %v1216
      %v1379 = vpop.f32.mrb[0].mxu0
      %v1380 = vadd.f32 %v1264, %v1379
      %v1381 = vpop.f32.mrb[0].mxu0
      %v1382 = vpop.f32.mrb[0].mxu0
      %v1383 = vadd.f32 %v1264, %v1382
      %v1384 = vpop.f32.mrb[0].mxu0
      %1385 = vmatprep.mubr.bf16.mxu0 0
      %1386 = vmatmul.mubr.bf16.gmra.mrb[0].mxu0 %v1217
      %v1387 = vpop.f32.mrb[0].mxu0
      %v1388 = vadd.f32 %v1264, %v1387
      %v1389 = vpop.f32.mrb[0].mxu0
      %v1390 = vpop.f32.mrb[0].mxu0
      %v1391 = vadd.f32 %v1264, %v1390
      %v1392 = vpop.f32.mrb[0].mxu0
      %1393 = vmatprep.mubr.bf16.mxu0 0
      %1394 = vmatmul.mubr.bf16.gmra.mrb[0].mxu0 %v1218
      %v1395 = vpop.f32.mrb[0].mxu0
      %v1396 = vadd.f32 %v1264, %v1395
      %v1397 = vpop.f32.mrb[0].mxu0
      %v1398 = vpop.f32.mrb[0].mxu0
      %v1399 = vadd.f32 %v1264, %v1398
      %v1400 = vpop.f32.mrb[0].mxu0
      %1401 = vmatprep.mubr.bf16.mxu0 0
      %1402 = vmatmul.mubr.bf16.gmra.mrb[0].mxu0 %v1219
      %v1403 = vpop.f32.mrb[0].mxu0
      %v1404 = vadd.f32 %v1264, %v1403
      %v1405 = vpop.f32.mrb[0].mxu0
      %v1406 = vpop.f32.mrb[0].mxu0
      %v1407 = vadd.f32 %v1264, %v1406
      %v1408 = vpop.f32.mrb[0].mxu0
      %1409 = vmatprep.mubr.bf16.mxu0 0
      %1410 = vmatmul.mubr.bf16.gmra.mrb[0].mxu0 %v1220
      %v1411 = vpop.f32.mrb[0].mxu0
      %v1412 = vadd.f32 %v1264, %v1411
      %v1413 = vpop.f32.mrb[0].mxu0
      %v1414 = vpop.f32.mrb[0].mxu0
      %v1415 = vadd.f32 %v1264, %v1414
      %v1416 = vpop.f32.mrb[0].mxu0
      %1417 = vmatprep.mubr.bf16.mxu0 0
      %1418 = vmatmul.mubr.bf16.gmra.mrb[0].mxu0 %v1221
      %v1419 = vpop.f32.mrb[0].mxu0
      %v1420 = vadd.f32 %v1264, %v1419
      %v1421 = vpop.f32.mrb[0].mxu0
      %v1422 = vpop.f32.mrb[0].mxu0
      %v1423 = vadd.f32 %v1264, %v1422
      %v1424 = vpop.f32.mrb[0].mxu0
      %1425 = vmatprep.mubr.bf16.mxu0 0
      %1426 = vmatmul.mubr.bf16.gmra.mrb[0].mxu0 %v1222
      %v1427 = vpop.f32.mrb[0].mxu0
      %v1428 = vadd.f32 %v1264, %v1427
      %v1429 = vpop.f32.mrb[0].mxu0
      %v1430 = vpop.f32.mrb[0].mxu0
      %v1431 = vadd.f32 %v1264, %v1430
      %v1432 = vpop.f32.mrb[0].mxu0
      %1433 = vmatprep.mubr.bf16.mxu0 0
      %1434 = vmatmul.mubr.bf16.gmra.mrb[0].mxu0 %v1223
      %v1435 = vpop.f32.mrb[0].mxu0
      %v1436 = vadd.f32 %v1264, %v1435
      %v1437 = vpop.f32.mrb[0].mxu0
      %v1438 = vpop.f32.mrb[0].mxu0
      %v1439 = vadd.f32 %v1264, %v1438
      %v1440 = vpop.f32.mrb[0].mxu0
      %1441 = vmatprep.mubr.bf16.mxu0 0
      %1442 = vmatmul.mubr.bf16.gmra.mrb[0].mxu0 %v1224
      %v1443 = vpop.f32.mrb[0].mxu0
      %v1444 = vadd.f32 %v1264, %v1443
      %v1445 = vpop.f32.mrb[0].mxu0
      %v1446 = vpop.f32.mrb[0].mxu0
      %v1447 = vadd.f32 %v1264, %v1446
      %v1448 = vpop.f32.mrb[0].mxu0
      %1449 = vmatprep.mubr.bf16.mxu0 0
      %1450 = vmatmul.mubr.bf16.gmra.mrb[0].mxu0 %v1225
      %v1451 = vpop.f32.mrb[0].mxu0
      %v1452 = vadd.f32 %v1264, %v1451
      %v1453 = vpop.f32.mrb[0].mxu0
      %v1454 = vpop.f32.mrb[0].mxu0
      %v1455 = vadd.f32 %v1264, %v1454
      %v1456 = vpop.f32.mrb[0].mxu0
      %1457 = vmatprep.mubr.bf16.mxu0 0
      %1458 = vmatmul.mubr.bf16.gmra.mrb[0].mxu0 %v1226
      %v1459 = vpop.f32.mrb[0].mxu0
      %v1460 = vadd.f32 %v1264, %v1459
      %v1461 = vpop.f32.mrb[0].mxu0
      %v1462 = vpop.f32.mrb[0].mxu0
      %v1463 = vadd.f32 %v1264, %v1462
      %v1464 = vpop.f32.mrb[0].mxu0
      %1465 = vmatprep.mubr.bf16.mxu0 0
      %1466 = vmatmul.mubr.bf16.gmra.mrb[0].mxu0 %v1227
      %v1467 = vpop.f32.mrb[0].mxu0
      %v1468 = vadd.f32 %v1264, %v1467
      %v1469 = vpop.f32.mrb[0].mxu0
      %v1470 = vpop.f32.mrb[0].mxu0
      %v1471 = vadd.f32 %v1264, %v1470
      %v1472 = vpop.f32.mrb[0].mxu0
      %1473 = vmatprep.mubr.bf16.mxu0 0
      %1474 = vmatmul.mubr.bf16.gmra.mrb[0].mxu0 %v1228
      %v1475 = vpop.f32.mrb[0].mxu0
      %v1476 = vadd.f32 %v1264, %v1475
      %v1477 = vpop.f32.mrb[0].mxu0
      %v1478 = vpop.f32.mrb[0].mxu0
      %v1479 = vadd.f32 %v1264, %v1478
      %v1480 = vpop.f32.mrb[0].mxu0
      %1481 = vmatprep.mubr.bf16.mxu0 0
      %1482 = vmatmul.mubr.bf16.gmra.mrb[0].mxu0 %v1229
      %v1483 = vpop.f32.mrb[0].mxu0
      %v1484 = vadd.f32 %v1264, %v1483
      %v1485 = vpop.f32.mrb[0].mxu0
      %v1486 = vpop.f32.mrb[0].mxu0
      %v1487 = vadd.f32 %v1264, %v1486
      %v1488 = vpop.f32.mrb[0].mxu0
      %1489 = vmatprep.mubr.bf16.mxu0 0
      %1490 = vmatmul.mubr.bf16.gmra.mrb[0].mxu0 %v1230
      %v1491 = vpop.f32.mrb[0].mxu0
      %v1492 = vadd.f32 %v1264, %v1491
      %v1493 = vpop.f32.mrb[0].mxu0
      %v1494 = vpop.f32.mrb[0].mxu0
      %v1495 = vadd.f32 %v1264, %v1494
      %v1496 = vpop.f32.mrb[0].mxu0
      %1497 = vmatprep.mubr.bf16.mxu0 0
      %1498 = vmatmul.mubr.bf16.gmra.mrb[0].mxu0 %v1231
      %v1499 = vpop.f32.mrb[0].mxu0
      %v1500 = vadd.f32 %v1264, %v1499
      %v1501 = vpop.f32.mrb[0].mxu0
      %v1502 = vpop.f32.mrb[0].mxu0
      %v1503 = vadd.f32 %v1264, %v1502
      %v1504 = vpop.f32.mrb[0].mxu0
      %1505 = vmatprep.mubr.bf16.mxu0 0
      %1506 = vmatmul.mubr.bf16.gmra.mrb[0].mxu0 %v1232
      %v1507 = vpop.f32.mrb[0].mxu0
      %v1508 = vadd.f32 %v1264, %v1507
      %v1509 = vpop.f32.mrb[0].mxu0
      %v1510 = vpop.f32.mrb[0].mxu0
      %v1511 = vadd.f32 %v1264, %v1510
      %v1512 = vpop.f32.mrb[0].mxu0
      %1513 = vmatprep.mubr.bf16.mxu0 0
      %1514 = vmatmul.mubr.bf16.gmra.mrb[0].mxu0 %v1233
      %v1515 = vpop.f32.mrb[0].mxu0
      %v1516 = vadd.f32 %v1264, %v1515
      %v1517 = vpop.f32.mrb[0].mxu0
      %v1518 = vpop.f32.mrb[0].mxu0
      %v1519 = vadd.f32 %v1264, %v1518
      %v1520 = vpop.f32.mrb[0].mxu0
      %1521 = vmatprep.mubr.bf16.mxu0 0
      %1522 = vmatmul.mubr.bf16.gmra.mrb[0].mxu0 %v1234
      %v1523 = vpop.f32.mrb[0].mxu0
      %v1524 = vadd.f32 %v1264, %v1523
      %v1525 = vpop.f32.mrb[0].mxu0
      %v1526 = vpop.f32.mrb[0].mxu0
      %v1527 = vadd.f32 %v1264, %v1526
      %v1528 = vpop.f32.mrb[0].mxu0
      %1529 = vmatprep.mubr.bf16.mxu0 0
      %1530 = vmatmul.mubr.bf16.gmra.mrb[0].mxu0 %v1235
      %v1531 = vpop.f32.mrb[0].mxu0
      %v1532 = vadd.f32 %v1264, %v1531
      %v1533 = vpop.f32.mrb[0].mxu0
      %v1534 = vpop.f32.mrb[0].mxu0
      %v1535 = vadd.f32 %v1264, %v1534
      %v1536 = vpop.f32.mrb[0].mxu0
      %1537 = vmatprep.mubr.bf16.mxu0 0
      %1538 = vmatmul.mubr.bf16.gmra.mrb[0].mxu0 %v1236
      %v1539 = vpop.f32.mrb[0].mxu0
      %v1540 = vadd.f32 %v1264, %v1539
      %v1541 = vpop.f32.mrb[0].mxu0
      %v1542 = vpop.f32.mrb[0].mxu0
      %v1543 = vadd.f32 %v1264, %v1542
      %v1544 = vpop.f32.mrb[0].mxu0
      %1545 = vmatprep.mubr.bf16.mxu0 0
      %1546 = vmatmul.mubr.bf16.gmra.mrb[0].mxu0 %v1237
      %v1547 = vpop.f32.mrb[0].mxu0
      %v1548 = vadd.f32 %v1264, %v1547
      %v1549 = vpop.f32.mrb[0].mxu0
      %v1550 = vpop.f32.mrb[0].mxu0
      %v1551 = vadd.f32 %v1264, %v1550
      %v1552 = vpop.f32.mrb[0].mxu0
      %1553 = vmatprep.mubr.bf16.mxu0 0
      %1554 = vmatmul.mubr.bf16.gmra.mrb[0].mxu0 %v1238
      %v1555 = vpop.f32.mrb[0].mxu0
      %v1556 = vadd.f32 %v1264, %v1555
      %v1557 = vpop.f32.mrb[0].mxu0
      %v1558 = vpop.f32.mrb[0].mxu0
      %v1559 = vadd.f32 %v1264, %v1558
      %v1560 = vpop.f32.mrb[0].mxu0
      %1561 = vmatprep.mubr.bf16.mxu0 0
      %1562 = vmatmul.mubr.bf16.gmra.mrb[0].mxu0 %v1239
      %v1563 = vpop.f32.mrb[0].mxu0
      %v1564 = vadd.f32 %v1264, %v1563
      %v1565 = vpop.f32.mrb[0].mxu0
      %v1566 = vpop.f32.mrb[0].mxu0
      %v1567 = vadd.f32 %v1264, %v1566
      %v1568 = vpop.f32.mrb[0].mxu0
      %1569 = vmatprep.mubr.bf16.mxu0 0
      %1570 = vmatmul.mubr.bf16.gmra.mrb[0].mxu0 %v1240
      %v1571 = vpop.f32.mrb[0].mxu0
      %v1572 = vadd.f32 %v1264, %v1571
      %v1573 = vpop.f32.mrb[0].mxu0
      %v1574 = vpop.f32.mrb[0].mxu0
      %v1575 = vadd.f32 %v1264, %v1574
      %v1576 = vpop.f32.mrb[0].mxu0
      %1577 = vmatprep.mubr.bf16.mxu0 0
      %1578 = vmatmul.mubr.bf16.gmra.mrb[0].mxu0 %v1241
      %v1579 = vpop.f32.mrb[0].mxu0
      %v1580 = vadd.f32 %v1264, %v1579
      %v1581 = vpop.f32.mrb[0].mxu0
      %v1582 = vpop.f32.mrb[0].mxu0
      %v1583 = vadd.f32 %v1264, %v1582
      %v1584 = vpop.f32.mrb[0].mxu0
      %1585 = vmatprep.mubr.bf16.mxu0 0
      %1586 = vmatmul.mubr.bf16.gmra.mrb[0].mxu0 %v1242
      %v1587 = vpop.f32.mrb[0].mxu0
      %v1588 = vadd.f32 %v1264, %v1587
      %v1589 = vpop.f32.mrb[0].mxu0
      %v1590 = vpop.f32.mrb[0].mxu0
      %v1591 = vadd.f32 %v1264, %v1590
      %v1592 = vpop.f32.mrb[0].mxu0
      %1593 = vmatprep.mubr.bf16.mxu0 0
      %1594 = vmatmul.mubr.bf16.gmra.mrb[0].mxu0 %v1243
      %v1595 = vpop.f32.mrb[0].mxu0
      %v1596 = vadd.f32 %v1264, %v1595
      %v1597 = vpop.f32.mrb[0].mxu0
      %v1598 = vpop.f32.mrb[0].mxu0
      %v1599 = vadd.f32 %v1264, %v1598
      %v1600 = vpop.f32.mrb[0].mxu0
      %1601 = vdwg.mxu0
      %vm1602 = vcmask 64512
      %1603 = vst.msk [vmem:[%s199] sm:$0xff] %vm1602, %v1348
      %1604 = vst.msk [vmem:[%s199 + $0x8] sm:$0xff] %vm1602, %v1351
      %1605 = vst.msk [vmem:[%s199 + $0x10] sm:$0xff] %vm1602, %v1356
      %1606 = vst.msk [vmem:[%s199 + $0x18] sm:$0xff] %vm1602, %v1359
      %1607 = vst.msk [vmem:[%s199 + $0x20] sm:$0xff] %vm1602, %v1364
      %1608 = vst.msk [vmem:[%s199 + $0x28] sm:$0xff] %vm1602, %v1367
      %1609 = vst.msk [vmem:[%s199 + $0x30] sm:$0xff] %vm1602, %v1372
      %1610 = vst.msk [vmem:[%s199 + $0x38] sm:$0xff] %vm1602, %v1375
      %1611 = vst.msk [vmem:[%s199 + $0x40] sm:$0xff] %vm1602, %v1380
      %1612 = vst.msk [vmem:[%s199 + $0x48] sm:$0xff] %vm1602, %v1383
      %1613 = vst.msk [vmem:[%s199 + $0x50] sm:$0xff] %vm1602, %v1388
      %1614 = vst.msk [vmem:[%s199 + $0x58] sm:$0xff] %vm1602, %v1391
      %1615 = vst.msk [vmem:[%s199 + $0x60] sm:$0xff] %vm1602, %v1396
      %1616 = vst.msk [vmem:[%s199 + $0x68] sm:$0xff] %vm1602, %v1399
      %1617 = vst.msk [vmem:[%s199 + $0x70] sm:$0xff] %vm1602, %v1404
      %1618 = vst.msk [vmem:[%s199 + $0x78] sm:$0xff] %vm1602, %v1407
      %1619 = vst.msk [vmem:[%s199 + $0x80] sm:$0xff] %vm1602, %v1412
      %1620 = vst.msk [vmem:[%s199 + $0x88] sm:$0xff] %vm1602, %v1415
      %1621 = vst.msk [vmem:[%s199 + $0x90] sm:$0xff] %vm1602, %v1420
      %1622 = vst.msk [vmem:[%s199 + $0x98] sm:$0xff] %vm1602, %v1423
      %1623 = vst.msk [vmem:[%s199 + $0xa0] sm:$0xff] %vm1602, %v1428
      %1624 = vst.msk [vmem:[%s199 + $0xa8] sm:$0xff] %vm1602, %v1431
      %1625 = vst.msk [vmem:[%s199 + $0xb0] sm:$0xff] %vm1602, %v1436
      %1626 = vst.msk [vmem:[%s199 + $0xb8] sm:$0xff] %vm1602, %v1439
      %1627 = vst.msk [vmem:[%s199 + $0xc0] sm:$0xff] %vm1602, %v1444
      %1628 = vst.msk [vmem:[%s199 + $0xc8] sm:$0xff] %vm1602, %v1447
      %1629 = vst.msk [vmem:[%s199 + $0xd0] sm:$0xff] %vm1602, %v1452
      %1630 = vst.msk [vmem:[%s199 + $0xd8] sm:$0xff] %vm1602, %v1455
      %1631 = vst.msk [vmem:[%s199 + $0xe0] sm:$0xff] %vm1602, %v1460
      %1632 = vst.msk [vmem:[%s199 + $0xe8] sm:$0xff] %vm1602, %v1463
      %1633 = vst.msk [vmem:[%s199 + $0xf0] sm:$0xff] %vm1602, %v1468
      %1634 = vst.msk [vmem:[%s199 + $0xf8] sm:$0xff] %vm1602, %v1471
      %1635 = vst.msk [vmem:[%s199 + $0x100] sm:$0xff] %vm1602, %v1476
      %1636 = vst.msk [vmem:[%s199 + $0x108] sm:$0xff] %vm1602, %v1479
      %1637 = vst.msk [vmem:[%s199 + $0x110] sm:$0xff] %vm1602, %v1484
      %1638 = vst.msk [vmem:[%s199 + $0x118] sm:$0xff] %vm1602, %v1487
      %1639 = vst.msk [vmem:[%s199 + $0x120] sm:$0xff] %vm1602, %v1492
      %1640 = vst.msk [vmem:[%s199 + $0x128] sm:$0xff] %vm1602, %v1495
      %1641 = vst.msk [vmem:[%s199 + $0x130] sm:$0xff] %vm1602, %v1500
      %1642 = vst.msk [vmem:[%s199 + $0x138] sm:$0xff] %vm1602, %v1503
      %1643 = vst.msk [vmem:[%s199 + $0x140] sm:$0xff] %vm1602, %v1508
      %1644 = vst.msk [vmem:[%s199 + $0x148] sm:$0xff] %vm1602, %v1511
      %1645 = vst.msk [vmem:[%s199 + $0x150] sm:$0xff] %vm1602, %v1516
      %1646 = vst.msk [vmem:[%s199 + $0x158] sm:$0xff] %vm1602, %v1519
      %1647 = vst.msk [vmem:[%s199 + $0x160] sm:$0xff] %vm1602, %v1524
      %1648 = vst.msk [vmem:[%s199 + $0x168] sm:$0xff] %vm1602, %v1527
      %1649 = vst.msk [vmem:[%s199 + $0x170] sm:$0xff] %vm1602, %v1532
      %1650 = vst.msk [vmem:[%s199 + $0x178] sm:$0xff] %vm1602, %v1535
      %1651 = vst.msk [vmem:[%s199 + $0x180] sm:$0xff] %vm1602, %v1540
      %1652 = vst.msk [vmem:[%s199 + $0x188] sm:$0xff] %vm1602, %v1543
      %1653 = vst.msk [vmem:[%s199 + $0x190] sm:$0xff] %vm1602, %v1548
      %1654 = vst.msk [vmem:[%s199 + $0x198] sm:$0xff] %vm1602, %v1551
      %1655 = vst.msk [vmem:[%s199 + $0x1a0] sm:$0xff] %vm1602, %v1556
      %1656 = vst.msk [vmem:[%s199 + $0x1a8] sm:$0xff] %vm1602, %v1559
      %1657 = vst.msk [vmem:[%s199 + $0x1b0] sm:$0xff] %vm1602, %v1564
      %1658 = vst.msk [vmem:[%s199 + $0x1b8] sm:$0xff] %vm1602, %v1567
      %1659 = vst.msk [vmem:[%s199 + $0x1c0] sm:$0xff] %vm1602, %v1572
      %1660 = vst.msk [vmem:[%s199 + $0x1c8] sm:$0xff] %vm1602, %v1575
      %1661 = vst.msk [vmem:[%s199 + $0x1d0] sm:$0xff] %vm1602, %v1580
      %1662 = vst.msk [vmem:[%s199 + $0x1d8] sm:$0xff] %vm1602, %v1583
      %1663 = vst.msk [vmem:[%s199 + $0x1e0] sm:$0xff] %vm1602, %v1588
      %1664 = vst.msk [vmem:[%s199 + $0x1e8] sm:$0xff] %vm1602, %v1591
      %1665 = vst.msk [vmem:[%s199 + $0x1f0] sm:$0xff] %vm1602, %v1596
      %1666 = vst.msk [vmem:[%s199 + $0x1f8] sm:$0xff] %vm1602, %v1599
      %s1667 = smul.u32 64, %s15
      %p1668 = scmp.lt.s32.totalorder %s1667, 127
      %s1669 = scalar_select %p1668, %s1667, 127
      %s1670 = smul.addr %s1669, 8
      %s1671 = scalar_lea.vmem %s4, %s1670
      // Predicated region
      $region37: #{dqn_forward.1} parent=35 // pred_check
        %p1672 = pneg %p122
      $region38: #{dqn_forward.1} parent=35 // pred_check_branch
        %1674 = sbr.rel (%p1672) target = $region40
      $region39: #{dqn_forward.1} parent=35 // pred_region
        %s1675 = smul.u32 64, %s15
      $region40: #{dqn_forward.1} parent=35 // pred_fallthru
        _
    $region36: #{dqn_forward.1} parent=5 // pred_fallthru
      _
    %p1676 = scmp.le.s32.totalorder 2, %s10
    // Predicated region
    $region41: #{dqn_forward.1} parent=5 // pred_check
      %p1677 = pneg %p1676
    $region42: #{dqn_forward.1} parent=5 // pred_check_branch
      %1679 = sbr.rel (%p1677) target = $region44
    $region43: #{dqn_forward.1} parent=5 // pred_region
      %s1680 = ssub.s32 %s10, 2
      // Predicated region
      $region45: #{dqn_forward.1} parent=43 // pred_check
        %p1681 = pneg %p128
      $region46: #{dqn_forward.1} parent=43 // pred_check_branch
        %1683 = sbr.rel (%p1681) target = $region48
      $region47: #{dqn_forward.1} parent=43 // pred_region
        %s1684 = smul.u32 64, %s16
        %p1685 = scmp.lt.s32.totalorder %s1684, 127
        %s1686 = scalar_select %p1685, %s1684, 127
        %s1687 = smul.addr %s1686, 8
        %s1688 = scalar_lea.vmem %s4, %s1687
      $region48: #{dqn_forward.1} parent=43 // pred_fallthru
        _
    $region44: #{dqn_forward.1} parent=5 // pred_fallthru
      _
  $region6: #{dqn_forward.1} parent=0 // loop_footer
    %s14 = sadd.s32 1, %s10
  $region7: #{dqn_forward.1} parent=0 // loop_footer_branch
    %9 = sbr.rel target = $region3
  $region8: #{dqn_forward.1} parent=0 // loop_exit
    _

</llo_original>
